<compile_context>
chip_gen: v6e
topology: v6e:2x2x1
jax: 0.10.0
libtpu: 0.0.40
codegen_flags: <defaults>
</compile_context>

<pallas_src>
import jax
import jax.numpy as jnp
from jax.experimental import pallas as pl
from jax.experimental.pallas import tpu as pltpu

EPS = 1e-5   # BatchNorm1d / PyG BatchNorm default eps
LANE = 128


def _round_up(x, m):
    return ((x + m - 1) // m) * m


def _pick_tile(n):
    # 512-wide row/reduction tiles are the measured sweet spot on v5e/v6e/v7x;
    # fall back to 128 for tiny graphs so we do not over-pad.
    return 512 if n > 512 else 128


def _partial_stats(h):
    """Pack per-tile [sum; sum_sq] over rows into an (1, 8, C) stats block."""
    ssum = jnp.sum(h, axis=0, keepdims=True)          # (1, C)
    ssq = jnp.sum(h * h, axis=0, keepdims=True)       # (1, C) one-pass E[x^2]
    row_id = jax.lax.broadcasted_iota(jnp.int32, (8, h.shape[1]), 0)
    st = jnp.where(row_id == 0, ssum, jnp.where(row_id == 1, ssq, 0.0))
    return st[None]                                    # (1, 8, C)


# ---------------------------------------------------------------------------
# Kernel A: h1 = x @ W1 + b1 per row tile, plus BN1 partial sums.
# ---------------------------------------------------------------------------
def linear_stats_kernel(n_ref, x_ref, w_ref, b_ref, h_ref, st_ref):
    tm = h_ref.shape[0]
    h = jnp.dot(x_ref[...], w_ref[...],
                preferred_element_type=jnp.float32) + b_ref[...]
    rows = pl.program_id(0) * tm + jax.lax.broadcasted_iota(jnp.int32, h.shape, 0)
    h = jnp.where(rows < n_ref[0], h, 0.0)   # zero padded rows -> exact stats
    h_ref[...] = h
    st_ref[...] = _partial_stats(h)


# ---------------------------------------------------------------------------
# Kernel B: h1w = (relu(BN1(h1))) @ W2 per row tile (bf16 output for the MXU).
# ---------------------------------------------------------------------------
def bn_relu_matmul_kernel(h_ref, scale_ref, shift_ref, w_ref, o_ref):
    a = jnp.maximum(h_ref[...] * scale_ref[...] + shift_ref[...], 0.0)
    o_ref[...] = jnp.dot(a.astype(jnp.bfloat16), w_ref[...],
                         preferred_element_type=jnp.float32).astype(o_ref.dtype)


# ---------------------------------------------------------------------------
# Kernel C: h2 = A_hat @ h1w + b2, tiled (rows "parallel", reduction
# "arbitrary"), block-sparse gating via SMEM occupancy mask, BN2 partial sums
# emitted on the last reduction step.
# ---------------------------------------------------------------------------
def aggregate_kernel(mask_ref, n_ref, a_ref, hw_ref, b_ref,
                     h2_ref, st_ref, acc_ref):
    i = pl.program_id(0)
    k = pl.program_id(1)
    nk = pl.num_programs(1)

    @pl.when(k == 0)
    def _init():
        acc_ref[...] = jnp.zeros_like(acc_ref)

    # Skip the MXU work for all-zero A_hat tiles (low-degree graphs are >99%
    # block-sparse at scale).
    # TODO(synk): go further with block-CSR scalar-prefetched column indices so
    # skipped tiles are never DMA'd at all.
    @pl.when(mask_ref[i * nk + k] != 0)
    def _accumulate():
        acc_ref[...] += jnp.dot(a_ref[...], hw_ref[...],
                                preferred_element_type=jnp.float32)

    @pl.when(k == nk - 1)
    def _finalize():
        tm = acc_ref.shape[0]
        h2 = acc_ref[...] + b_ref[...]
        rows = i * tm + jax.lax.broadcasted_iota(jnp.int32, h2.shape, 0)
        h2 = jnp.where(rows < n_ref[0], h2, 0.0)
        h2_ref[...] = h2
        st_ref[...] = _partial_stats(h2)


# ---------------------------------------------------------------------------
# Kernel D: out = relu(BN2(h2)) per row tile (lane-dense f32 store).
# ---------------------------------------------------------------------------
def bn_relu_kernel(h_ref, scale_ref, shift_ref, o_ref):
    o_ref[...] = jnp.maximum(h_ref[...] * scale_ref[...] + shift_ref[...], 0.0)


# ---------------------------------------------------------------------------
# Graph preprocessing: built ONCE per graph (depends only on edge_index) and
# cached by the caller — hoisted out of the per-forward path.
# ---------------------------------------------------------------------------
def prepare_graph(edge_index, num_nodes):
    tile = _pick_tile(num_nodes)
    n_pad = _round_up(num_nodes, tile)
    src, dst = edge_index[0], edge_index[1]
    a = jnp.zeros((num_nodes, num_nodes), jnp.float32).at[dst, src].add(1.0)
    # PyG gcn_norm: add_remaining_self_loops (don't double-count existing ones)
    diag = jnp.diagonal(a)
    a = a + jnp.diag(jnp.where(diag > 0.0, 0.0, 1.0))
    deg = jnp.sum(a, axis=1)
    dinv = jnp.where(deg > 0.0, jax.lax.rsqrt(deg), 0.0)
    a_hat = dinv[:, None] * a * dinv[None, :]     # A_hat[dst, src]

    a_pad = jnp.zeros((n_pad, n_pad), jnp.float32).at[:num_nodes, :num_nodes].set(a_hat)
    nt = n_pad // tile
    occ = (a_pad.reshape(nt, tile, nt, tile) != 0.0).any(axis=(1, 3))
    block_mask = occ.astype(jnp.int32).reshape(-1)   # 1-D for SMEM
    return a_pad.astype(jnp.bfloat16), block_mask


# ---------------------------------------------------------------------------
# Forward
# ---------------------------------------------------------------------------
def encoder_layer_forward(x, graph, params):
    a_pad, block_mask = graph
    n, in_ch = x.shape
    out_ch = params["w1"].shape[1]
    tile = _pick_tile(n)
    n_pad = a_pad.shape[0]
    nt = n_pad // tile
    c_in = _round_up(in_ch, LANE)
    c_out = _round_up(out_ch, LANE)

    # --- pad operands to lane/sublane-native shapes; bf16 for MXU inputs ---
    x_p = jnp.zeros((n_pad, c_in), jnp.bfloat16).at[:n, :in_ch].set(
        x.astype(jnp.bfloat16))
    w1_p = jnp.zeros((c_in, c_out), jnp.bfloat16).at[:in_ch, :out_ch].set(
        params["w1"].astype(jnp.bfloat16))
    w2_p = jnp.zeros((c_out, c_out), jnp.bfloat16).at[:out_ch, :out_ch].set(
        params["w2"].astype(jnp.bfloat16))

    def pad_vec(v):   # affine params padded with 0 so padded channels output 0
        return jnp.zeros((1, c_out), jnp.float32).at[:, :out_ch].set(
            v.reshape(1, -1).astype(jnp.float32))

    b1_p, g1_p, be1_p = pad_vec(params["b1"]), pad_vec(params["g1"]), pad_vec(params["be1"])
    b2_p, g2_p, be2_p = pad_vec(params["b2"]), pad_vec(params["g2"]), pad_vec(params["be2"])

    n_scalar = jnp.array([n], jnp.int32)
    stats_shape = jax.ShapeDtypeStruct((nt, 8, c_out), jnp.float32)

    # ---- Call A: linear + BN1 partial stats (rows parallel) ----
    h1, stats1 = pl.pallas_call(
        linear_stats_kernel,
        out_shape=(jax.ShapeDtypeStruct((n_pad, c_out), jnp.float32), stats_shape),
        grid_spec=pltpu.PrefetchScalarGridSpec(
            num_scalar_prefetch=1,
            grid=(nt,),
            in_specs=[
                pl.BlockSpec((tile, c_in), lambda i, n_s: (i, 0)),
                pl.BlockSpec((c_in, c_out), lambda i, n_s: (0, 0)),
                pl.BlockSpec((1, c_out), lambda i, n_s: (0, 0)),
            ],
            out_specs=(
                pl.BlockSpec((tile, c_out), lambda i, n_s: (i, 0)),
                pl.BlockSpec((1, 8, c_out), lambda i, n_s: (i, 0, 0)),
            ),
        ),
        compiler_params=pltpu.CompilerParams(dimension_semantics=("parallel",)),
    )(n_scalar, x_p, w1_p, b1_p)

    def bn_affine(stats, gamma, beta):
        # training-mode (biased) batch stats; tiny [nt, C] finalize in XLA
        ssum = jnp.sum(stats[:, 0, :], axis=0, keepdims=True)
        ssq = jnp.sum(stats[:, 1, :], axis=0, keepdims=True)
        mean = ssum / n
        var = jnp.maximum(ssq / n - mean * mean, 0.0)
        scale = gamma * jax.lax.rsqrt(var + EPS)
        shift = beta - mean * scale
        return scale, shift

    scale1, shift1 = bn_affine(stats1, g1_p, be1_p)

    # ---- Call B: BN1 + ReLU + @W2 (rows parallel, bf16 out) ----
    h1w = pl.pallas_call(
        bn_relu_matmul_kernel,
        out_shape=jax.ShapeDtypeStruct((n_pad, c_out), jnp.bfloat16),
        grid=(nt,),
        in_specs=[
            pl.BlockSpec((tile, c_out), lambda i: (i, 0)),
            pl.BlockSpec((1, c_out), lambda i: (0, 0)),
            pl.BlockSpec((1, c_out), lambda i: (0, 0)),
            pl.BlockSpec((c_out, c_out), lambda i: (0, 0)),
        ],
        out_specs=pl.BlockSpec((tile, c_out), lambda i: (i, 0)),
        compiler_params=pltpu.CompilerParams(dimension_semantics=("parallel",)),
    )(h1, scale1, shift1, w2_p)

    # ---- Call C: tiled A_hat @ H aggregation + bias + BN2 partial stats ----
    h2, stats2 = pl.pallas_call(
        aggregate_kernel,
        out_shape=(jax.ShapeDtypeStruct((n_pad, c_out), jnp.float32), stats_shape),
        grid_spec=pltpu.PrefetchScalarGridSpec(
            num_scalar_prefetch=2,
            grid=(nt, nt),
            in_specs=[
                pl.BlockSpec((tile, tile), lambda i, k, m, n_s: (i, k)),
                pl.BlockSpec((tile, c_out), lambda i, k, m, n_s: (k, 0)),
                pl.BlockSpec((1, c_out), lambda i, k, m, n_s: (0, 0)),
            ],
            out_specs=(
                pl.BlockSpec((tile, c_out), lambda i, k, m, n_s: (i, 0)),
                pl.BlockSpec((1, 8, c_out), lambda i, k, m, n_s: (i, 0, 0)),
            ),
            scratch_shapes=[pltpu.VMEM((tile, c_out), jnp.float32)],
        ),
        compiler_params=pltpu.CompilerParams(
            dimension_semantics=("parallel", "arbitrary")),
    )(block_mask, n_scalar, a_pad, h1w, b2_p)

    scale2, shift2 = bn_affine(stats2, g2_p, be2_p)

    # ---- Call D: BN2 + ReLU (rows parallel, lane-dense store) ----
    out_p = pl.pallas_call(
        bn_relu_kernel,
        out_shape=jax.ShapeDtypeStruct((n_pad, c_out), jnp.float32),
        grid=(nt,),
        in_specs=[
            pl.BlockSpec((tile, c_out), lambda i: (i, 0)),
            pl.BlockSpec((1, c_out), lambda i: (0, 0)),
            pl.BlockSpec((1, c_out), lambda i: (0, 0)),
        ],
        out_specs=pl.BlockSpec((tile, c_out), lambda i: (i, 0)),
        compiler_params=pltpu.CompilerParams(dimension_semantics=("parallel",)),
    )(h2, scale2, shift2)

    return out_p[:n, :out_ch]


def init_params(key, in_channels, out_channels):
    k1, k2 = jax.random.split(key)
    scale1 = 1.0 / jnp.sqrt(in_channels)
    scale2 = 1.0 / jnp.sqrt(out_channels)
    return {
        # Linear(in, out): stored pre-transposed as [in, out]
        "w1": jax.random.uniform(k1, (in_channels, out_channels),
                                 jnp.float32, -scale1, scale1),
        "b1": jnp.zeros((1, out_channels), jnp.float32),
        # BatchNorm1d affine
        "g1": jnp.ones((1, out_channels), jnp.float32),
        "be1": jnp.zeros((1, out_channels), jnp.float32),
        # GCNConv linear weight [out, out] + bias
        "w2": jax.random.uniform(k2, (out_channels, out_channels),
                                 jnp.float32, -scale2, scale2),
        "b2": jnp.zeros((1, out_channels), jnp.float32),
        # PyG BatchNorm affine
        "g2": jnp.ones((1, out_channels), jnp.float32),
        "be2": jnp.zeros((1, out_channels), jnp.float32),
    }


if __name__ == "__main__":
    N = 16          # nodes
    IN_CH = 8
    OUT_CH = 16

    key = jax.random.PRNGKey(0)
    kx, kp = jax.random.split(key)
    x = jax.random.normal(kx, (N, IN_CH), jnp.float32)

    # deterministic bidirectional ring graph: i <-> (i+1) % N
    fwd = jnp.stack([jnp.arange(N), (jnp.arange(N) + 1) % N])
    bwd = jnp.stack([(jnp.arange(N) + 1) % N, jnp.arange(N)])
    edge_index = jnp.concatenate([fwd, bwd], axis=1).astype(jnp.int32)  # [2, 2N]

    params = init_params(kp, IN_CH, OUT_CH)

    # adjacency + block mask built once per graph and reused across forwards
    graph = prepare_graph(edge_index, N)

    forward = jax.jit(encoder_layer_forward)
    out = forward(x, graph, params)
    jax.block_until_ready(out)
    assert out.shape == (N, OUT_CH)
    print("KERNEL_OK")
</pallas_src>

<mosaic_0001>
module attributes {stable_mosaic.version = 11 : i64} {
  func.func @linear_stats_kernel(%arg0: i32, %arg1: memref<1xi32, #tpu.memory_space<smem>>, %arg2: memref<128x128xbf16, #tpu.memory_space<vmem>>, %arg3: memref<128x128xbf16, #tpu.memory_space<vmem>>, %arg4: memref<1x128xf32, #tpu.memory_space<vmem>>, %arg5: memref<128x128xf32, #tpu.memory_space<vmem>>, %arg6: memref<1x8x128xf32, #tpu.memory_space<vmem>>) attributes {dimension_semantics = [#tpu.dimension_semantics<parallel>], iteration_bounds = array<i64: 1>, scalar_prefetch = 1 : i64, scratch_operands = 0 : i64, tpu.core_type = #tpu.core_type<tc>, window_params = [{transform_indices = @transform_0, window_bounds = array<i64: 128, 128>}, {pipeline_mode = #tpu.pipeline_mode<synchronous>, transform_indices = @transform_1, window_bounds = array<i64: 128, 128>}, {pipeline_mode = #tpu.pipeline_mode<synchronous>, transform_indices = @transform_2, window_bounds = array<i64: 1, 128>}, {transform_indices = @transform_3, window_bounds = array<i64: 128, 128>}, {transform_indices = @transform_4, window_bounds = array<i64: 1, 8, 128>}]} {
    %c0 = arith.constant 0 : index
    %c0_0 = arith.constant 0 : index
    %0 = vector.load %arg2[%c0, %c0_0] : memref<128x128xbf16, #tpu.memory_space<vmem>>, vector<128x128xbf16>
    %c0_1 = arith.constant 0 : index
    %c0_2 = arith.constant 0 : index
    %1 = vector.load %arg3[%c0_1, %c0_2] : memref<128x128xbf16, #tpu.memory_space<vmem>>, vector<128x128xbf16>
    %cst = arith.constant dense<0.000000e+00> : vector<128x128xf32>
    %2 = tpu.matmul %0, %1, %cst {dimension_numbers = #tpu.dot_dimension_numbers<[1], [0], [0], [1], [0, 0, 1, 1], [], []>} : vector<128x128xbf16>, vector<128x128xbf16>, vector<128x128xf32> -> vector<128x128xf32>
    %c0_3 = arith.constant 0 : index
    %c0_4 = arith.constant 0 : index
    %3 = vector.load %arg4[%c0_3, %c0_4] : memref<1x128xf32, #tpu.memory_space<vmem>>, vector<1x128xf32>
    %4 = vector.broadcast %3 : vector<1x128xf32> to vector<128x128xf32>
    %5 = arith.addf %2, %4 : vector<128x128xf32>
    %c128_i32 = arith.constant 128 : i32
    %6 = arith.muli %arg0, %c128_i32 : i32
    %7 = tpu.iota {dimensions = array<i32: 0>} : vector<128x128xi32>
    %8 = vector.broadcast %6 : i32 to vector<128x128xi32>
    %9 = arith.addi %8, %7 : vector<128x128xi32>
    %c0_5 = arith.constant 0 : index
    %10 = memref.load %arg1[%c0_5] : memref<1xi32, #tpu.memory_space<smem>>
    %11 = vector.broadcast %10 : i32 to vector<128x128xi32>
    %12 = arith.cmpi slt, %9, %11 : vector<128x128xi32>
    %cst_6 = arith.constant 0.000000e+00 : f32
    %13 = vector.broadcast %cst_6 : f32 to vector<128x128xf32>
    %14 = arith.select %12, %5, %13 : vector<128x128xi1>, vector<128x128xf32>
    %c0_7 = arith.constant 0 : index
    %c0_8 = arith.constant 0 : index
    %15 = vector.load %arg5[%c0_7, %c0_8] : memref<128x128xf32, #tpu.memory_space<vmem>>, vector<128x128xf32>
    tpu.vector_store %arg5[%c0_7, %c0_8], %14 {strides = array<i32>} : memref<128x128xf32, #tpu.memory_space<vmem>>, vector<128x128xf32>,
    %cst_9 = arith.constant dense<0.000000e+00> : vector<128xf32>
    %16 = vector.multi_reduction <add>, %14, %cst_9 [0] : vector<128x128xf32> to vector<128xf32>
    %17 = vector.shape_cast %16 : vector<128xf32> to vector<1x128xf32>
    %18 = arith.mulf %14, %14 : vector<128x128xf32>
    %cst_10 = arith.constant dense<0.000000e+00> : vector<128xf32>
    %19 = vector.multi_reduction <add>, %18, %cst_10 [0] : vector<128x128xf32> to vector<128xf32>
    %20 = vector.shape_cast %19 : vector<128xf32> to vector<1x128xf32>
    %21 = tpu.iota {dimensions = array<i32: 0>} : vector<8x128xi32>
    %c0_i32 = arith.constant 0 : i32
    %22 = vector.broadcast %c0_i32 : i32 to vector<8x128xi32>
    %23 = arith.cmpi eq, %21, %22 : vector<8x128xi32>
    %c1_i32 = arith.constant 1 : i32
    %24 = vector.broadcast %c1_i32 : i32 to vector<8x128xi32>
    %25 = arith.cmpi eq, %21, %24 : vector<8x128xi32>
    %cst_11 = arith.constant 0.000000e+00 : f32
    %26 = vector.shape_cast %20 : vector<1x128xf32> to vector<1x128xf32>
    %27 = vector.broadcast %26 : vector<1x128xf32> to vector<8x128xf32>
    %28 = vector.broadcast %cst_11 : f32 to vector<8x128xf32>
    %29 = arith.select %25, %27, %28 : vector<8x128xi1>, vector<8x128xf32>
    %30 = vector.shape_cast %17 : vector<1x128xf32> to vector<1x128xf32>
    %31 = vector.broadcast %30 : vector<1x128xf32> to vector<8x128xf32>
    %32 = arith.select %23, %31, %29 : vector<8x128xi1>, vector<8x128xf32>
    %33 = vector.shape_cast %32 : vector<8x128xf32> to vector<1x8x128xf32>
    %c0_12 = arith.constant 0 : index
    %c0_13 = arith.constant 0 : index
    %c0_14 = arith.constant 0 : index
    %34 = vector.load %arg6[%c0_12, %c0_13, %c0_14] : memref<1x8x128xf32, #tpu.memory_space<vmem>>, vector<1x8x128xf32>
    tpu.vector_store %arg6[%c0_12, %c0_13, %c0_14], %33 {strides = array<i32>} : memref<1x8x128xf32, #tpu.memory_space<vmem>>, vector<1x8x128xf32>,
    return
  }
  func.func @transform_0(%arg0: i32, %arg1: memref<1xi32, #tpu.memory_space<smem>>) -> (i32, i32) {
    %c0_i32 = arith.constant 0 : i32
    %c0_i32_0 = arith.constant 0 : i32
    return %arg0, %c0_i32 : i32, i32
  }
  func.func @transform_1(%arg0: i32, %arg1: memref<1xi32, #tpu.memory_space<smem>>) -> (i32, i32) {
    %c0_i32 = arith.constant 0 : i32
    %c0_i32_0 = arith.constant 0 : i32
    %c0_i32_1 = arith.constant 0 : i32
    return %c0_i32, %c0_i32_0 : i32, i32
  }
  func.func @transform_2(%arg0: i32, %arg1: memref<1xi32, #tpu.memory_space<smem>>) -> (i32, i32) {
    %c0_i32 = arith.constant 0 : i32
    %c0_i32_0 = arith.constant 0 : i32
    %c0_i32_1 = arith.constant 0 : i32
    return %c0_i32, %c0_i32_0 : i32, i32
  }
  func.func @transform_3(%arg0: i32, %arg1: memref<1xi32, #tpu.memory_space<smem>>) -> (i32, i32) {
    %c0_i32 = arith.constant 0 : i32
    %c0_i32_0 = arith.constant 0 : i32
    return %arg0, %c0_i32 : i32, i32
  }
  func.func @transform_4(%arg0: i32, %arg1: memref<1xi32, #tpu.memory_space<smem>>) -> (i32, i32, i32) {
    %c0_i32 = arith.constant 0 : i32
    %c0_i32_0 = arith.constant 0 : i32
    %c0_i32_1 = arith.constant 0 : i32
    return %arg0, %c0_i32, %c0_i32_0 : i32, i32, i32
  }
}

module attributes {stable_mosaic.version = 11 : i64} {
  func.func @bn_relu_kernel(%arg0: i32, %arg1: memref<128x128xf32, #tpu.memory_space<vmem>>, %arg2: memref<1x128xf32, #tpu.memory_space<vmem>>, %arg3: memref<1x128xf32, #tpu.memory_space<vmem>>, %arg4: memref<128x128xf32, #tpu.memory_space<vmem>>) attributes {dimension_semantics = [#tpu.dimension_semantics<parallel>], iteration_bounds = array<i64: 1>, scalar_prefetch = 0 : i64, scratch_operands = 0 : i64, tpu.core_type = #tpu.core_type<tc>, window_params = [{transform_indices = @transform_0, window_bounds = array<i64: 128, 128>}, {pipeline_mode = #tpu.pipeline_mode<synchronous>, transform_indices = @transform_1, window_bounds = array<i64: 1, 128>}, {pipeline_mode = #tpu.pipeline_mode<synchronous>, transform_indices = @transform_2, window_bounds = array<i64: 1, 128>}, {transform_indices = @transform_3, window_bounds = array<i64: 128, 128>}]} {
    %c0 = arith.constant 0 : index
    %c0_0 = arith.constant 0 : index
    %0 = vector.load %arg1[%c0, %c0_0] : memref<128x128xf32, #tpu.memory_space<vmem>>, vector<128x128xf32>
    %c0_1 = arith.constant 0 : index
    %c0_2 = arith.constant 0 : index
    %1 = vector.load %arg2[%c0_1, %c0_2] : memref<1x128xf32, #tpu.memory_space<vmem>>, vector<1x128xf32>
    %2 = vector.broadcast %1 : vector<1x128xf32> to vector<128x128xf32>
    %3 = arith.mulf %0, %2 : vector<128x128xf32>
    %c0_3 = arith.constant 0 : index
    %c0_4 = arith.constant 0 : index
    %4 = vector.load %arg3[%c0_3, %c0_4] : memref<1x128xf32, #tpu.memory_space<vmem>>, vector<1x128xf32>
    %5 = vector.broadcast %4 : vector<1x128xf32> to vector<128x128xf32>
    %6 = arith.addf %3, %5 : vector<128x128xf32>
    %cst = arith.constant 0.000000e+00 : f32
    %7 = vector.broadcast %cst : f32 to vector<128x128xf32>
    %8 = arith.maximumf %6, %7 : vector<128x128xf32>
    %c0_5 = arith.constant 0 : index
    %c0_6 = arith.constant 0 : index
    %9 = vector.load %arg4[%c0_5, %c0_6] : memref<128x128xf32, #tpu.memory_space<vmem>>, vector<128x128xf32>
    tpu.vector_store %arg4[%c0_5, %c0_6], %8 {strides = array<i32>} : memref<128x128xf32, #tpu.memory_space<vmem>>, vector<128x128xf32>,
    return
  }
  func.func @transform_0(%arg0: i32) -> (i32, i32) {
    %c0_i32 = arith.constant 0 : i32
    %c0_i32_0 = arith.constant 0 : i32
    return %arg0, %c0_i32 : i32, i32
  }
  func.func @transform_1(%arg0: i32) -> (i32, i32) {
    %c0_i32 = arith.constant 0 : i32
    %c0_i32_0 = arith.constant 0 : i32
    %c0_i32_1 = arith.constant 0 : i32
    return %c0_i32, %c0_i32_0 : i32, i32
  }
  func.func @transform_2(%arg0: i32) -> (i32, i32) {
    %c0_i32 = arith.constant 0 : i32
    %c0_i32_0 = arith.constant 0 : i32
    %c0_i32_1 = arith.constant 0 : i32
    return %c0_i32, %c0_i32_0 : i32, i32
  }
  func.func @transform_3(%arg0: i32) -> (i32, i32) {
    %c0_i32 = arith.constant 0 : i32
    %c0_i32_0 = arith.constant 0 : i32
    return %arg0, %c0_i32 : i32, i32
  }
}

module attributes {stable_mosaic.version = 11 : i64} {
  func.func @aggregate_kernel(%arg0: i32, %arg1: i32, %arg2: memref<1xi32, #tpu.memory_space<smem>>, %arg3: memref<1xi32, #tpu.memory_space<smem>>, %arg4: memref<128x128xbf16, #tpu.memory_space<vmem>>, %arg5: memref<128x128xbf16, #tpu.memory_space<vmem>>, %arg6: memref<1x128xf32, #tpu.memory_space<vmem>>, %arg7: memref<128x128xf32, #tpu.memory_space<vmem>>, %arg8: memref<1x8x128xf32, #tpu.memory_space<vmem>>, %arg9: memref<128x128xf32, #tpu.memory_space<vmem>>) attributes {dimension_semantics = [#tpu.dimension_semantics<parallel>, #tpu.dimension_semantics<arbitrary>], iteration_bounds = array<i64: 1, 1>, scalar_prefetch = 2 : i64, scratch_operands = 1 : i64, tpu.core_type = #tpu.core_type<tc>, window_params = [{transform_indices = @transform_0, window_bounds = array<i64: 128, 128>}, {transform_indices = @transform_1, window_bounds = array<i64: 128, 128>}, {pipeline_mode = #tpu.pipeline_mode<synchronous>, transform_indices = @transform_2, window_bounds = array<i64: 1, 128>}, {transform_indices = @transform_3, window_bounds = array<i64: 128, 128>}, {transform_indices = @transform_4, window_bounds = array<i64: 1, 8, 128>}]} {
    %c0_i32 = arith.constant 0 : i32
    %0 = arith.cmpi eq, %arg1, %c0_i32 : i32
    %1 = arith.extui %0 : i1 to i32
    %c0_i32_0 = arith.constant 0 : i32
    %2 = arith.cmpi ne, %1, %c0_i32_0 : i32
    scf.if %2 {
      %cst = arith.constant 0.000000e+00 : f32
      %13 = vector.broadcast %cst : f32 to vector<128x128xf32>
      %c0 = arith.constant 0 : index
      %c0_5 = arith.constant 0 : index
      %14 = vector.load %arg9[%c0, %c0_5] : memref<128x128xf32, #tpu.memory_space<vmem>>, vector<128x128xf32>
      tpu.vector_store %arg9[%c0, %c0_5], %13 {strides = array<i32>} : memref<128x128xf32, #tpu.memory_space<vmem>>, vector<128x128xf32>,
    } else {
    }
    %c1_i32 = arith.constant 1 : i32
    %3 = arith.muli %arg0, %c1_i32 : i32
    %4 = arith.addi %3, %arg1 : i32
    %5 = arith.index_cast %4 : i32 to index
    %6 = memref.load %arg2[%5] : memref<1xi32, #tpu.memory_space<smem>>
    %c0_i32_1 = arith.constant 0 : i32
    %7 = arith.cmpi ne, %6, %c0_i32_1 : i32
    %8 = arith.extui %7 : i1 to i32
    %c0_i32_2 = arith.constant 0 : i32
    %9 = arith.cmpi ne, %8, %c0_i32_2 : i32
    scf.if %9 {
      %c0 = arith.constant 0 : index
      %c0_5 = arith.constant 0 : index
      %13 = vector.load %arg9[%c0, %c0_5] : memref<128x128xf32, #tpu.memory_space<vmem>>, vector<128x128xf32>
      %c0_6 = arith.constant 0 : index
      %c0_7 = arith.constant 0 : index
      %14 = vector.load %arg4[%c0_6, %c0_7] : memref<128x128xbf16, #tpu.memory_space<vmem>>, vector<128x128xbf16>
      %c0_8 = arith.constant 0 : index
      %c0_9 = arith.constant 0 : index
      %15 = vector.load %arg5[%c0_8, %c0_9] : memref<128x128xbf16, #tpu.memory_space<vmem>>, vector<128x128xbf16>
      %cst = arith.constant dense<0.000000e+00> : vector<128x128xf32>
      %16 = tpu.matmul %14, %15, %cst {dimension_numbers = #tpu.dot_dimension_numbers<[1], [0], [0], [1], [0, 0, 1, 1], [], []>} : vector<128x128xbf16>, vector<128x128xbf16>, vector<128x128xf32> -> vector<128x128xf32>
      %17 = arith.addf %13, %16 : vector<128x128xf32>
      %c0_10 = arith.constant 0 : index
      %c0_11 = arith.constant 0 : index
      %18 = vector.load %arg9[%c0_10, %c0_11] : memref<128x128xf32, #tpu.memory_space<vmem>>, vector<128x128xf32>
      tpu.vector_store %arg9[%c0_10, %c0_11], %17 {strides = array<i32>} : memref<128x128xf32, #tpu.memory_space<vmem>>, vector<128x128xf32>,
    } else {
    }
    %c0_i32_3 = arith.constant 0 : i32
    %10 = arith.cmpi eq, %arg1, %c0_i32_3 : i32
    %11 = arith.extui %10 : i1 to i32
    %c0_i32_4 = arith.constant 0 : i32
    %12 = arith.cmpi ne, %11, %c0_i32_4 : i32
    scf.if %12 {
      %c0 = arith.constant 0 : index
      %c0_5 = arith.constant 0 : index
      %13 = vector.load %arg9[%c0, %c0_5] : memref<128x128xf32, #tpu.memory_space<vmem>>, vector<128x128xf32>
      %c0_6 = arith.constant 0 : index
      %c0_7 = arith.constant 0 : index
      %14 = vector.load %arg6[%c0_6, %c0_7] : memref<1x128xf32, #tpu.memory_space<vmem>>, vector<1x128xf32>
      %15 = vector.broadcast %14 : vector<1x128xf32> to vector<128x128xf32>
      %16 = arith.addf %13, %15 : vector<128x128xf32>
      %c128_i32 = arith.constant 128 : i32
      %17 = arith.muli %arg0, %c128_i32 : i32
      %18 = tpu.iota {dimensions = array<i32: 0>} : vector<128x128xi32>
      %19 = vector.broadcast %17 : i32 to vector<128x128xi32>
      %20 = arith.addi %19, %18 : vector<128x128xi32>
      %c0_8 = arith.constant 0 : index
      %21 = memref.load %arg3[%c0_8] : memref<1xi32, #tpu.memory_space<smem>>
      %22 = vector.broadcast %21 : i32 to vector<128x128xi32>
      %23 = arith.cmpi slt, %20, %22 : vector<128x128xi32>
      %cst = arith.constant 0.000000e+00 : f32
      %24 = vector.broadcast %cst : f32 to vector<128x128xf32>
      %25 = arith.select %23, %16, %24 : vector<128x128xi1>, vector<128x128xf32>
      %c0_9 = arith.constant 0 : index
      %c0_10 = arith.constant 0 : index
      %26 = vector.load %arg7[%c0_9, %c0_10] : memref<128x128xf32, #tpu.memory_space<vmem>>, vector<128x128xf32>
      tpu.vector_store %arg7[%c0_9, %c0_10], %25 {strides = array<i32>} : memref<128x128xf32, #tpu.memory_space<vmem>>, vector<128x128xf32>,
      %cst_11 = arith.constant dense<0.000000e+00> : vector<128xf32>
      %27 = vector.multi_reduction <add>, %25, %cst_11 [0] : vector<128x128xf32> to vector<128xf32>
      %28 = vector.shape_cast %27 : vector<128xf32> to vector<1x128xf32>
      %29 = arith.mulf %25, %25 : vector<128x128xf32>
      %cst_12 = arith.constant dense<0.000000e+00> : vector<128xf32>
      %30 = vector.multi_reduction <add>, %29, %cst_12 [0] : vector<128x128xf32> to vector<128xf32>
      %31 = vector.shape_cast %30 : vector<128xf32> to vector<1x128xf32>
      %32 = tpu.iota {dimensions = array<i32: 0>} : vector<8x128xi32>
      %c0_i32_13 = arith.constant 0 : i32
      %33 = vector.broadcast %c0_i32_13 : i32 to vector<8x128xi32>
      %34 = arith.cmpi eq, %32, %33 : vector<8x128xi32>
      %c1_i32_14 = arith.constant 1 : i32
      %35 = vector.broadcast %c1_i32_14 : i32 to vector<8x128xi32>
      %36 = arith.cmpi eq, %32, %35 : vector<8x128xi32>
      %cst_15 = arith.constant 0.000000e+00 : f32
      %37 = vector.shape_cast %31 : vector<1x128xf32> to vector<1x128xf32>
      %38 = vector.broadcast %37 : vector<1x128xf32> to vector<8x128xf32>
      %39 = vector.broadcast %cst_15 : f32 to vector<8x128xf32>
      %40 = arith.select %36, %38, %39 : vector<8x128xi1>, vector<8x128xf32>
      %41 = vector.shape_cast %28 : vector<1x128xf32> to vector<1x128xf32>
      %42 = vector.broadcast %41 : vector<1x128xf32> to vector<8x128xf32>
      %43 = arith.select %34, %42, %40 : vector<8x128xi1>, vector<8x128xf32>
      %44 = vector.shape_cast %43 : vector<8x128xf32> to vector<1x8x128xf32>
      %c0_16 = arith.constant 0 : index
      %c0_17 = arith.constant 0 : index
      %c0_18 = arith.constant 0 : index
      %45 = vector.load %arg8[%c0_16, %c0_17, %c0_18] : memref<1x8x128xf32, #tpu.memory_space<vmem>>, vector<1x8x128xf32>
      tpu.vector_store %arg8[%c0_16, %c0_17, %c0_18], %44 {strides = array<i32>} : memref<1x8x128xf32, #tpu.memory_space<vmem>>, vector<1x8x128xf32>,
    } else {
    }
    return
  }
  func.func @transform_0(%arg0: i32, %arg1: i32, %arg2: memref<1xi32, #tpu.memory_space<smem>>, %arg3: memref<1xi32, #tpu.memory_space<smem>>) -> (i32, i32) {
    %c0_i32 = arith.constant 0 : i32
    return %arg0, %arg1 : i32, i32
  }
  func.func @transform_1(%arg0: i32, %arg1: i32, %arg2: memref<1xi32, #tpu.memory_space<smem>>, %arg3: memref<1xi32, #tpu.memory_space<smem>>) -> (i32, i32) {
    %c0_i32 = arith.constant 0 : i32
    %c0_i32_0 = arith.constant 0 : i32
    return %arg1, %c0_i32 : i32, i32
  }
  func.func @transform_2(%arg0: i32, %arg1: i32, %arg2: memref<1xi32, #tpu.memory_space<smem>>, %arg3: memref<1xi32, #tpu.memory_space<smem>>) -> (i32, i32) {
    %c0_i32 = arith.constant 0 : i32
    %c0_i32_0 = arith.constant 0 : i32
    %c0_i32_1 = arith.constant 0 : i32
    return %c0_i32, %c0_i32_0 : i32, i32
  }
  func.func @transform_3(%arg0: i32, %arg1: i32, %arg2: memref<1xi32, #tpu.memory_space<smem>>, %arg3: memref<1xi32, #tpu.memory_space<smem>>) -> (i32, i32) {
    %c0_i32 = arith.constant 0 : i32
    %c0_i32_0 = arith.constant 0 : i32
    return %arg0, %c0_i32 : i32, i32
  }
  func.func @transform_4(%arg0: i32, %arg1: i32, %arg2: memref<1xi32, #tpu.memory_space<smem>>, %arg3: memref<1xi32, #tpu.memory_space<smem>>) -> (i32, i32, i32) {
    %c0_i32 = arith.constant 0 : i32
    %c0_i32_0 = arith.constant 0 : i32
    %c0_i32_1 = arith.constant 0 : i32
    return %arg0, %c0_i32, %c0_i32_0 : i32, i32, i32
  }
}

module attributes {stable_mosaic.version = 11 : i64} {
  func.func @bn_relu_matmul_kernel(%arg0: i32, %arg1: memref<128x128xf32, #tpu.memory_space<vmem>>, %arg2: memref<1x128xf32, #tpu.memory_space<vmem>>, %arg3: memref<1x128xf32, #tpu.memory_space<vmem>>, %arg4: memref<128x128xbf16, #tpu.memory_space<vmem>>, %arg5: memref<128x128xbf16, #tpu.memory_space<vmem>>) attributes {dimension_semantics = [#tpu.dimension_semantics<parallel>], iteration_bounds = array<i64: 1>, scalar_prefetch = 0 : i64, scratch_operands = 0 : i64, tpu.core_type = #tpu.core_type<tc>, window_params = [{transform_indices = @transform_0, window_bounds = array<i64: 128, 128>}, {pipeline_mode = #tpu.pipeline_mode<synchronous>, transform_indices = @transform_1, window_bounds = array<i64: 1, 128>}, {pipeline_mode = #tpu.pipeline_mode<synchronous>, transform_indices = @transform_2, window_bounds = array<i64: 1, 128>}, {pipeline_mode = #tpu.pipeline_mode<synchronous>, transform_indices = @transform_3, window_bounds = array<i64: 128, 128>}, {transform_indices = @transform_4, window_bounds = array<i64: 128, 128>}]} {
    %c0 = arith.constant 0 : index
    %c0_0 = arith.constant 0 : index
    %0 = vector.load %arg1[%c0, %c0_0] : memref<128x128xf32, #tpu.memory_space<vmem>>, vector<128x128xf32>
    %c0_1 = arith.constant 0 : index
    %c0_2 = arith.constant 0 : index
    %1 = vector.load %arg2[%c0_1, %c0_2] : memref<1x128xf32, #tpu.memory_space<vmem>>, vector<1x128xf32>
    %2 = vector.broadcast %1 : vector<1x128xf32> to vector<128x128xf32>
    %3 = arith.mulf %0, %2 : vector<128x128xf32>
    %c0_3 = arith.constant 0 : index
    %c0_4 = arith.constant 0 : index
    %4 = vector.load %arg3[%c0_3, %c0_4] : memref<1x128xf32, #tpu.memory_space<vmem>>, vector<1x128xf32>
    %5 = vector.broadcast %4 : vector<1x128xf32> to vector<128x128xf32>
    %6 = arith.addf %3, %5 : vector<128x128xf32>
    %cst = arith.constant 0.000000e+00 : f32
    %7 = vector.broadcast %cst : f32 to vector<128x128xf32>
    %8 = arith.maximumf %6, %7 : vector<128x128xf32>
    %9 = arith.truncf %8 : vector<128x128xf32> to vector<128x128xbf16>
    %c0_5 = arith.constant 0 : index
    %c0_6 = arith.constant 0 : index
    %10 = vector.load %arg4[%c0_5, %c0_6] : memref<128x128xbf16, #tpu.memory_space<vmem>>, vector<128x128xbf16>
    %cst_7 = arith.constant dense<0.000000e+00> : vector<128x128xf32>
    %11 = tpu.matmul %9, %10, %cst_7 {dimension_numbers = #tpu.dot_dimension_numbers<[1], [0], [0], [1], [0, 0, 1, 1], [], []>} : vector<128x128xbf16>, vector<128x128xbf16>, vector<128x128xf32> -> vector<128x128xf32>
    %12 = arith.truncf %11 : vector<128x128xf32> to vector<128x128xbf16>
    %c0_8 = arith.constant 0 : index
    %c0_9 = arith.constant 0 : index
    %13 = vector.load %arg5[%c0_8, %c0_9] : memref<128x128xbf16, #tpu.memory_space<vmem>>, vector<128x128xbf16>
    tpu.vector_store %arg5[%c0_8, %c0_9], %12 {strides = array<i32>} : memref<128x128xbf16, #tpu.memory_space<vmem>>, vector<128x128xbf16>,
    return
  }
  func.func @transform_0(%arg0: i32) -> (i32, i32) {
    %c0_i32 = arith.constant 0 : i32
    %c0_i32_0 = arith.constant 0 : i32
    return %arg0, %c0_i32 : i32, i32
  }
  func.func @transform_1(%arg0: i32) -> (i32, i32) {
    %c0_i32 = arith.constant 0 : i32
    %c0_i32_0 = arith.constant 0 : i32
    %c0_i32_1 = arith.constant 0 : i32
    return %c0_i32, %c0_i32_0 : i32, i32
  }
  func.func @transform_2(%arg0: i32) -> (i32, i32) {
    %c0_i32 = arith.constant 0 : i32
    %c0_i32_0 = arith.constant 0 : i32
    %c0_i32_1 = arith.constant 0 : i32
    return %c0_i32, %c0_i32_0 : i32, i32
  }
  func.func @transform_3(%arg0: i32) -> (i32, i32) {
    %c0_i32 = arith.constant 0 : i32
    %c0_i32_0 = arith.constant 0 : i32
    %c0_i32_1 = arith.constant 0 : i32
    return %c0_i32, %c0_i32_0 : i32, i32
  }
  func.func @transform_4(%arg0: i32) -> (i32, i32) {
    %c0_i32 = arith.constant 0 : i32
    %c0_i32_0 = arith.constant 0 : i32
    return %arg0, %c0_i32 : i32, i32
  }
}

</mosaic_0001>

<llo_original>
// kernel: encoder_layer_forward.7
$region0: #{encoder_layer_forward.7}
  #allocation0 [shape = 'u32[]', space=smem, size = 0x4, offset = 0x4, fixed_abs, tag = 'smem constant byte address 0x4 - core index']
  #allocation1 [shape = 'u32[144,128]{1,0:T(1,128)}', space=vmem, size = 0x12000, scoped, tag = 'internal scratch']
  %s0 = inlined_call_operand.vmem [shape: f32[128,128], index: 0, kind: input, shape index: {}]
  %s1 = inlined_call_operand.vmem [shape: f32[1,128], index: 1, kind: input, shape index: {}]
  %s2 = inlined_call_operand.vmem [shape: f32[1,128], index: 2, kind: input, shape index: {}]
  %s3 = inlined_call_operand.vmem [shape: f32[128,128], index: 3, kind: output, shape index: {}]
  %s4 = sld [smem:[#allocation0]]
  $region22: #{encoder_layer_forward.7} parent=0
    _
  %s6 = ssub.s32 1, %s4
  %s7 = scalar_select 0, %s6, %s4
  // Predicated region
  $region2: #{encoder_layer_forward.7} parent=0 // pred_check
    _
  $region3: #{encoder_layer_forward.7} parent=0 // pred_check_branch
    %9 = sbr.rel (0) target = $region5
  $region4: #{encoder_layer_forward.7} parent=0 // pred_region
    _
  $region5: #{encoder_layer_forward.7} parent=0 // pred_fallthru
    _
  // Predicated region
  $region6: #{encoder_layer_forward.7} parent=0 // pred_check
    _
  $region7: #{encoder_layer_forward.7} parent=0 // pred_check_branch
    %11 = sbr.rel (0) target = $region9
  $region8: #{encoder_layer_forward.7} parent=0 // pred_region
    _
  $region9: #{encoder_layer_forward.7} parent=0 // pred_fallthru
    _
  // Predicated region
  $region10: #{encoder_layer_forward.7} parent=0 // pred_check
    _
  $region11: #{encoder_layer_forward.7} parent=0 // pred_check_branch
    %13 = sbr.rel (0) target = $region13
  $region12: #{encoder_layer_forward.7} parent=0 // pred_region
    _
  $region13: #{encoder_layer_forward.7} parent=0 // pred_fallthru
    _
  %v14 = vld [vmem:[%s0] sm:$0xff]
  %v15 = vld [vmem:[%s0 + $0x8] sm:$0xff]
  %v16 = vld [vmem:[%s0 + $0x10] sm:$0xff]
  %v17 = vld [vmem:[%s0 + $0x18] sm:$0xff]
  %v18 = vld [vmem:[%s0 + $0x20] sm:$0xff]
  %v19 = vld [vmem:[%s0 + $0x28] sm:$0xff]
  %v20 = vld [vmem:[%s0 + $0x30] sm:$0xff]
  %v21 = vld [vmem:[%s0 + $0x38] sm:$0xff]
  %v22 = vld [vmem:[%s0 + $0x40] sm:$0xff]
  %v23 = vld [vmem:[%s0 + $0x48] sm:$0xff]
  %v24 = vld [vmem:[%s0 + $0x50] sm:$0xff]
  %v25 = vld [vmem:[%s0 + $0x58] sm:$0xff]
  %v26 = vld [vmem:[%s0 + $0x60] sm:$0xff]
  %v27 = vld [vmem:[%s0 + $0x68] sm:$0xff]
  %v28 = vld [vmem:[%s0 + $0x70] sm:$0xff]
  %v29 = vld [vmem:[%s0 + $0x78] sm:$0xff]
  %v30 = vld [vmem:[%s1] sm:$0x1]
  %v32 = vlaneseq
  %v33 = vshrl.u32 %v32, 7
  %v34 = vsub.s32 0, %v33
  %v35 = vrot.slane %v30, %v34
  %v37 = vmul.f32 %v14, %v35
  %v38 = vmul.f32 %v15, %v35
  %v39 = vmul.f32 %v16, %v35
  %v40 = vmul.f32 %v17, %v35
  %v41 = vmul.f32 %v18, %v35
  %v42 = vmul.f32 %v19, %v35
  %v43 = vmul.f32 %v20, %v35
  %v44 = vmul.f32 %v21, %v35
  %v45 = vmul.f32 %v22, %v35
  %v46 = vmul.f32 %v23, %v35
  %v47 = vmul.f32 %v24, %v35
  %v48 = vmul.f32 %v25, %v35
  %v49 = vmul.f32 %v26, %v35
  %v50 = vmul.f32 %v27, %v35
  %v51 = vmul.f32 %v28, %v35
  %v52 = vmul.f32 %v29, %v35
  %v53 = vld [vmem:[%s2] sm:$0x1]
  %v55 = vlaneseq
  %v56 = vshrl.u32 %v55, 7
  %v57 = vsub.s32 0, %v56
  %v58 = vrot.slane %v53, %v57
  %v60 = vadd.f32 %v37, %v58
  %v61 = vadd.f32 %v38, %v58
  %v62 = vadd.f32 %v39, %v58
  %v63 = vadd.f32 %v40, %v58
  %v64 = vadd.f32 %v41, %v58
  %v65 = vadd.f32 %v42, %v58
  %v66 = vadd.f32 %v43, %v58
  %v67 = vadd.f32 %v44, %v58
  %v68 = vadd.f32 %v45, %v58
  %v69 = vadd.f32 %v46, %v58
  %v70 = vadd.f32 %v47, %v58
  %v71 = vadd.f32 %v48, %v58
  %v72 = vadd.f32 %v49, %v58
  %v73 = vadd.f32 %v50, %v58
  %v74 = vadd.f32 %v51, %v58
  %v75 = vadd.f32 %v52, %v58
  %v76 = vmax.f32 %v60, 0.0
  %v77 = vmax.f32 %v61, 0.0
  %v78 = vmax.f32 %v62, 0.0
  %v79 = vmax.f32 %v63, 0.0
  %v80 = vmax.f32 %v64, 0.0
  %v81 = vmax.f32 %v65, 0.0
  %v82 = vmax.f32 %v66, 0.0
  %v83 = vmax.f32 %v67, 0.0
  %v84 = vmax.f32 %v68, 0.0
  %v85 = vmax.f32 %v69, 0.0
  %v86 = vmax.f32 %v70, 0.0
  %v87 = vmax.f32 %v71, 0.0
  %v88 = vmax.f32 %v72, 0.0
  %v89 = vmax.f32 %v73, 0.0
  %v90 = vmax.f32 %v74, 0.0
  %v91 = vmax.f32 %v75, 0.0
  %92 = vst [vmem:[%s3] sm:$0xff] %v76
  %93 = vst [vmem:[%s3 + $0x8] sm:$0xff] %v77
  %94 = vst [vmem:[%s3 + $0x10] sm:$0xff] %v78
  %95 = vst [vmem:[%s3 + $0x18] sm:$0xff] %v79
  %96 = vst [vmem:[%s3 + $0x20] sm:$0xff] %v80
  %97 = vst [vmem:[%s3 + $0x28] sm:$0xff] %v81
  %98 = vst [vmem:[%s3 + $0x30] sm:$0xff] %v82
  %99 = vst [vmem:[%s3 + $0x38] sm:$0xff] %v83
  %100 = vst [vmem:[%s3 + $0x40] sm:$0xff] %v84
  %101 = vst [vmem:[%s3 + $0x48] sm:$0xff] %v85
  %102 = vst [vmem:[%s3 + $0x50] sm:$0xff] %v86
  %103 = vst [vmem:[%s3 + $0x58] sm:$0xff] %v87
  %104 = vst [vmem:[%s3 + $0x60] sm:$0xff] %v88
  %105 = vst [vmem:[%s3 + $0x68] sm:$0xff] %v89
  %106 = vst [vmem:[%s3 + $0x70] sm:$0xff] %v90
  %107 = vst [vmem:[%s3 + $0x78] sm:$0xff] %v91
  // Predicated region
  $region14: #{encoder_layer_forward.7} parent=0 // pred_check
    _
  $region15: #{encoder_layer_forward.7} parent=0 // pred_check_branch
    %109 = sbr.rel (0) target = $region17
  $region16: #{encoder_layer_forward.7} parent=0 // pred_region
    _
  $region17: #{encoder_layer_forward.7} parent=0 // pred_fallthru
    _
  // Predicated region
  $region18: #{encoder_layer_forward.7} parent=0 // pred_check
    _
  $region19: #{encoder_layer_forward.7} parent=0 // pred_check_branch
    %111 = sbr.rel (0) target = $region21
  $region20: #{encoder_layer_forward.7} parent=0 // pred_region
    _
  $region21: #{encoder_layer_forward.7} parent=0 // pred_fallthru
    _

// kernel: encoder_layer_forward.5
$region0: #{encoder_layer_forward.5}
  #allocation0 [shape = 'u32[]', space=smem, size = 0x4, offset = 0x4, fixed_abs, tag = 'smem constant byte address 0x4 - core index']
  #allocation1 [shape = 'u32[144,128]{1,0:T(1,128)}', space=vmem, size = 0x12000, scoped, tag = 'internal scratch']
  %s0 = inlined_call_operand.vmem [shape: f32[128,128], index: 0, kind: input, shape index: {}]
  %s1 = inlined_call_operand.vmem [shape: f32[1,128], index: 1, kind: input, shape index: {}]
  %s2 = inlined_call_operand.vmem [shape: f32[1,128], index: 2, kind: input, shape index: {}]
  %s3 = inlined_call_operand.vmem [shape: bf16[128,128], index: 3, kind: input, shape index: {}]
  %s4 = inlined_call_operand.vmem [shape: bf16[128,128], index: 4, kind: output, shape index: {}]
  %s5 = sld [smem:[#allocation0]]
  $region26: #{encoder_layer_forward.5} parent=0
    _
  %s7 = ssub.s32 1, %s5
  %s8 = scalar_select 0, %s7, %s5
  // Predicated region
  $region2: #{encoder_layer_forward.5} parent=0 // pred_check
    _
  $region3: #{encoder_layer_forward.5} parent=0 // pred_check_branch
    %10 = sbr.rel (0) target = $region5
  $region4: #{encoder_layer_forward.5} parent=0 // pred_region
    _
  $region5: #{encoder_layer_forward.5} parent=0 // pred_fallthru
    _
  // Predicated region
  $region6: #{encoder_layer_forward.5} parent=0 // pred_check
    _
  $region7: #{encoder_layer_forward.5} parent=0 // pred_check_branch
    %12 = sbr.rel (0) target = $region9
  $region8: #{encoder_layer_forward.5} parent=0 // pred_region
    _
  $region9: #{encoder_layer_forward.5} parent=0 // pred_fallthru
    _
  // Predicated region
  $region10: #{encoder_layer_forward.5} parent=0 // pred_check
    _
  $region11: #{encoder_layer_forward.5} parent=0 // pred_check_branch
    %14 = sbr.rel (0) target = $region13
  $region12: #{encoder_layer_forward.5} parent=0 // pred_region
    _
  $region13: #{encoder_layer_forward.5} parent=0 // pred_fallthru
    _
  // Predicated region
  $region14: #{encoder_layer_forward.5} parent=0 // pred_check
    _
  $region15: #{encoder_layer_forward.5} parent=0 // pred_check_branch
    %16 = sbr.rel (0) target = $region17
  $region16: #{encoder_layer_forward.5} parent=0 // pred_region
    _
  $region17: #{encoder_layer_forward.5} parent=0 // pred_fallthru
    _
  %v18 = vld [vmem:[%s0] sm:$0xff]
  %v19 = vld [vmem:[%s0 + $0x8] sm:$0xff]
  %v20 = vld [vmem:[%s0 + $0x10] sm:$0xff]
  %v21 = vld [vmem:[%s0 + $0x18] sm:$0xff]
  %v22 = vld [vmem:[%s0 + $0x20] sm:$0xff]
  %v23 = vld [vmem:[%s0 + $0x28] sm:$0xff]
  %v24 = vld [vmem:[%s0 + $0x30] sm:$0xff]
  %v25 = vld [vmem:[%s0 + $0x38] sm:$0xff]
  %v26 = vld [vmem:[%s0 + $0x40] sm:$0xff]
  %v27 = vld [vmem:[%s0 + $0x48] sm:$0xff]
  %v28 = vld [vmem:[%s0 + $0x50] sm:$0xff]
  %v29 = vld [vmem:[%s0 + $0x58] sm:$0xff]
  %v30 = vld [vmem:[%s0 + $0x60] sm:$0xff]
  %v31 = vld [vmem:[%s0 + $0x68] sm:$0xff]
  %v32 = vld [vmem:[%s0 + $0x70] sm:$0xff]
  %v33 = vld [vmem:[%s0 + $0x78] sm:$0xff]
  %v34 = vld [vmem:[%s1] sm:$0x1]
  %v36 = vlaneseq
  %v37 = vshrl.u32 %v36, 7
  %v38 = vsub.s32 0, %v37
  %v39 = vrot.slane %v34, %v38
  %v41 = vmul.f32 %v18, %v39
  %v42 = vmul.f32 %v19, %v39
  %v43 = vmul.f32 %v20, %v39
  %v44 = vmul.f32 %v21, %v39
  %v45 = vmul.f32 %v22, %v39
  %v46 = vmul.f32 %v23, %v39
  %v47 = vmul.f32 %v24, %v39
  %v48 = vmul.f32 %v25, %v39
  %v49 = vmul.f32 %v26, %v39
  %v50 = vmul.f32 %v27, %v39
  %v51 = vmul.f32 %v28, %v39
  %v52 = vmul.f32 %v29, %v39
  %v53 = vmul.f32 %v30, %v39
  %v54 = vmul.f32 %v31, %v39
  %v55 = vmul.f32 %v32, %v39
  %v56 = vmul.f32 %v33, %v39
  %v57 = vld [vmem:[%s2] sm:$0x1]
  %v59 = vlaneseq
  %v60 = vshrl.u32 %v59, 7
  %v61 = vsub.s32 0, %v60
  %v62 = vrot.slane %v57, %v61
  %v64 = vadd.f32 %v41, %v62
  %v65 = vadd.f32 %v42, %v62
  %v66 = vadd.f32 %v43, %v62
  %v67 = vadd.f32 %v44, %v62
  %v68 = vadd.f32 %v45, %v62
  %v69 = vadd.f32 %v46, %v62
  %v70 = vadd.f32 %v47, %v62
  %v71 = vadd.f32 %v48, %v62
  %v72 = vadd.f32 %v49, %v62
  %v73 = vadd.f32 %v50, %v62
  %v74 = vadd.f32 %v51, %v62
  %v75 = vadd.f32 %v52, %v62
  %v76 = vadd.f32 %v53, %v62
  %v77 = vadd.f32 %v54, %v62
  %v78 = vadd.f32 %v55, %v62
  %v79 = vadd.f32 %v56, %v62
  %v80 = vmax.f32 %v64, 0.0
  %v81 = vmax.f32 %v65, 0.0
  %v82 = vmax.f32 %v66, 0.0
  %v83 = vmax.f32 %v67, 0.0
  %v84 = vmax.f32 %v68, 0.0
  %v85 = vmax.f32 %v69, 0.0
  %v86 = vmax.f32 %v70, 0.0
  %v87 = vmax.f32 %v71, 0.0
  %v88 = vmax.f32 %v72, 0.0
  %v89 = vmax.f32 %v73, 0.0
  %v90 = vmax.f32 %v74, 0.0
  %v91 = vmax.f32 %v75, 0.0
  %v92 = vmax.f32 %v76, 0.0
  %v93 = vmax.f32 %v77, 0.0
  %v94 = vmax.f32 %v78, 0.0
  %v95 = vmax.f32 %v79, 0.0
  %v96 = vpack.c.bf16 %v81, %v80
  %v97 = vpack.c.bf16 %v83, %v82
  %v98 = vpack.c.bf16 %v85, %v84
  %v99 = vpack.c.bf16 %v87, %v86
  %v100 = vpack.c.bf16 %v89, %v88
  %v101 = vpack.c.bf16 %v91, %v90
  %v102 = vpack.c.bf16 %v93, %v92
  %v103 = vpack.c.bf16 %v95, %v94
  %v104 = vld [vmem:[%s3] sm:$0xf]
  %v105 = vld [vmem:[%s3 + $0x4] sm:$0xf]
  %v106 = vld [vmem:[%s3 + $0x8] sm:$0xf]
  %v107 = vld [vmem:[%s3 + $0xc] sm:$0xf]
  %v108 = vld [vmem:[%s3 + $0x10] sm:$0xf]
  %v109 = vld [vmem:[%s3 + $0x14] sm:$0xf]
  %v110 = vld [vmem:[%s3 + $0x18] sm:$0xf]
  %v111 = vld [vmem:[%s3 + $0x1c] sm:$0xf]
  %v112 = vld [vmem:[%s3 + $0x20] sm:$0xf]
  %v113 = vld [vmem:[%s3 + $0x24] sm:$0xf]
  %v114 = vld [vmem:[%s3 + $0x28] sm:$0xf]
  %v115 = vld [vmem:[%s3 + $0x2c] sm:$0xf]
  %v116 = vld [vmem:[%s3 + $0x30] sm:$0xf]
  %v117 = vld [vmem:[%s3 + $0x34] sm:$0xf]
  %v118 = vld [vmem:[%s3 + $0x38] sm:$0xf]
  %v119 = vld [vmem:[%s3 + $0x3c] sm:$0xf]
  %v136 = vunpack.c.l.b16 %v104
  %v137 = vunpack.c.l.b16 %v105
  %v138 = vunpack.c.l.b16 %v106
  %v139 = vunpack.c.l.b16 %v107
  %v140 = vunpack.c.l.b16 %v108
  %v141 = vunpack.c.l.b16 %v109
  %v142 = vunpack.c.l.b16 %v110
  %v143 = vunpack.c.l.b16 %v111
  %v144 = vunpack.c.l.b16 %v112
  %v145 = vunpack.c.l.b16 %v113
  %v146 = vunpack.c.l.b16 %v114
  %v147 = vunpack.c.l.b16 %v115
  %v148 = vunpack.c.l.b16 %v116
  %v149 = vunpack.c.l.b16 %v117
  %v150 = vunpack.c.l.b16 %v118
  %v151 = vunpack.c.l.b16 %v119
  %v152 = vpack.c.b16 %v137, %v136
  %v153 = vpack.c.b16 %v139, %v138
  %v154 = vpack.c.b16 %v141, %v140
  %v155 = vpack.c.b16 %v143, %v142
  %v156 = vpack.c.b16 %v145, %v144
  %v157 = vpack.c.b16 %v147, %v146
  %v158 = vpack.c.b16 %v149, %v148
  %v159 = vpack.c.b16 %v151, %v150
  %168 = vmatprep.subr.bf16.mxu0 0
  %169 = vmatpush1.bf16.msra.mxu0 %v159
  %170 = vmatprep.subr.bf16.mxu0 0
  %171 = vmatpush1.bf16.msra.mxu0 %v158
  %172 = vmatprep.subr.bf16.mxu0 0
  %173 = vmatpush1.bf16.msra.mxu0 %v157
  %174 = vmatprep.subr.bf16.mxu0 0
  %175 = vmatpush1.bf16.msra.mxu0 %v156
  %176 = vmatprep.subr.bf16.mxu0 0
  %177 = vmatpush1.bf16.msra.mxu0 %v155
  %178 = vmatprep.subr.bf16.mxu0 0
  %179 = vmatpush1.bf16.msra.mxu0 %v154
  %180 = vmatprep.subr.bf16.mxu0 0
  %181 = vmatpush1.bf16.msra.mxu0 %v153
  %182 = vmatprep.subr.bf16.mxu0 0
  %183 = vmatpush1.bf16.msra.mxu0 %v152
  %184 = vmatprep.subr.bf16.mxu0 0
  %185 = vmatpush2.bf16.msra.mxu0 0
  %186 = vmatprep.subr.bf16.mxu0 0
  %187 = vmatpush2.bf16.msra.mxu0 0
  %188 = vmatprep.subr.bf16.mxu0 0
  %189 = vmatpush2.bf16.msra.mxu0 0
  %190 = vmatprep.subr.bf16.mxu0 0
  %191 = vmatpush2.bf16.msra.mxu0 0
  %192 = vmatprep.subr.bf16.mxu0 0
  %193 = vmatpush2.bf16.msra.mxu0 0
  %194 = vmatprep.subr.bf16.mxu0 0
  %195 = vmatpush2.bf16.msra.mxu0 0
  %196 = vmatprep.subr.bf16.mxu0 0
  %197 = vmatpush2.bf16.msra.mxu0 0
  %198 = vmatprep.subr.bf16.mxu0 0
  %199 = vmatpush2.bf16.msra.mxu0 0
  %200 = vmatprep.mubr.bf16.mxu0 0
  %201 = vmatmul.mubr.bf16.gmra.mxu0 %v96
  %v202 = vpop.f32.mrf.mxu0
  %v203 = vadd.f32 0.0, %v202
  %v204 = vpop.f32.mrf.mxu0
  %v205 = vpop.f32.mrf.mxu0
  %v206 = vadd.f32 0.0, %v205
  %v207 = vpop.f32.mrf.mxu0
  %208 = vmatprep.mubr.bf16.mxu0 0
  %209 = vmatmul.mubr.bf16.gmra.mxu0 %v97
  %v210 = vpop.f32.mrf.mxu0
  %v211 = vadd.f32 0.0, %v210
  %v212 = vpop.f32.mrf.mxu0
  %v213 = vpop.f32.mrf.mxu0
  %v214 = vadd.f32 0.0, %v213
  %v215 = vpop.f32.mrf.mxu0
  %216 = vmatprep.mubr.bf16.mxu0 0
  %217 = vmatmul.mubr.bf16.gmra.mxu0 %v98
  %v218 = vpop.f32.mrf.mxu0
  %v219 = vadd.f32 0.0, %v218
  %v220 = vpop.f32.mrf.mxu0
  %v221 = vpop.f32.mrf.mxu0
  %v222 = vadd.f32 0.0, %v221
  %v223 = vpop.f32.mrf.mxu0
  %224 = vmatprep.mubr.bf16.mxu0 0
  %225 = vmatmul.mubr.bf16.gmra.mxu0 %v99
  %v226 = vpop.f32.mrf.mxu0
  %v227 = vadd.f32 0.0, %v226
  %v228 = vpop.f32.mrf.mxu0
  %v229 = vpop.f32.mrf.mxu0
  %v230 = vadd.f32 0.0, %v229
  %v231 = vpop.f32.mrf.mxu0
  %232 = vmatprep.mubr.bf16.mxu0 0
  %233 = vmatmul.mubr.bf16.gmra.mxu0 %v100
  %v234 = vpop.f32.mrf.mxu0
  %v235 = vadd.f32 0.0, %v234
  %v236 = vpop.f32.mrf.mxu0
  %v237 = vpop.f32.mrf.mxu0
  %v238 = vadd.f32 0.0, %v237
  %v239 = vpop.f32.mrf.mxu0
  %240 = vmatprep.mubr.bf16.mxu0 0
  %241 = vmatmul.mubr.bf16.gmra.mxu0 %v101
  %v242 = vpop.f32.mrf.mxu0
  %v243 = vadd.f32 0.0, %v242
  %v244 = vpop.f32.mrf.mxu0
  %v245 = vpop.f32.mrf.mxu0
  %v246 = vadd.f32 0.0, %v245
  %v247 = vpop.f32.mrf.mxu0
  %248 = vmatprep.mubr.bf16.mxu0 0
  %249 = vmatmul.mubr.bf16.gmra.mxu0 %v102
  %v250 = vpop.f32.mrf.mxu0
  %v251 = vadd.f32 0.0, %v250
  %v252 = vpop.f32.mrf.mxu0
  %v253 = vpop.f32.mrf.mxu0
  %v254 = vadd.f32 0.0, %v253
  %v255 = vpop.f32.mrf.mxu0
  %256 = vmatprep.mubr.bf16.mxu0 0
  %257 = vmatmul.mubr.bf16.gmra.mxu0 %v103
  %v258 = vpop.f32.mrf.mxu0
  %v259 = vadd.f32 0.0, %v258
  %v260 = vpop.f32.mrf.mxu0
  %v261 = vpop.f32.mrf.mxu0
  %v262 = vadd.f32 0.0, %v261
  %v263 = vpop.f32.mrf.mxu0
  %264 = vdwg.mxu0
  %v265 = vpack.c.bf16 %v206, %v203
  %v266 = vpack.c.bf16 %v214, %v211
  %v267 = vpack.c.bf16 %v222, %v219
  %v268 = vpack.c.bf16 %v230, %v227
  %v269 = vpack.c.bf16 %v238, %v235
  %v270 = vpack.c.bf16 %v246, %v243
  %v271 = vpack.c.bf16 %v254, %v251
  %v272 = vpack.c.bf16 %v262, %v259
  %v281 = vunpack.c.l.b16 %v265
  %v282 = vunpack.c.h.b16 %v265
  %v283 = vunpack.c.l.b16 %v266
  %v284 = vunpack.c.h.b16 %v266
  %v285 = vunpack.c.l.b16 %v267
  %v286 = vunpack.c.h.b16 %v267
  %v287 = vunpack.c.l.b16 %v268
  %v288 = vunpack.c.h.b16 %v268
  %v289 = vunpack.c.l.b16 %v269
  %v290 = vunpack.c.h.b16 %v269
  %v291 = vunpack.c.l.b16 %v270
  %v292 = vunpack.c.h.b16 %v270
  %v293 = vunpack.c.l.b16 %v271
  %v294 = vunpack.c.h.b16 %v271
  %v295 = vunpack.c.l.b16 %v272
  %v296 = vunpack.c.h.b16 %v272
  %v297 = vpack.c.b16 %v281, %v281
  %v298 = vpack.c.b16 %v282, %v282
  %v299 = vpack.c.b16 %v283, %v283
  %v300 = vpack.c.b16 %v284, %v284
  %v301 = vpack.c.b16 %v285, %v285
  %v302 = vpack.c.b16 %v286, %v286
  %v303 = vpack.c.b16 %v287, %v287
  %v304 = vpack.c.b16 %v288, %v288
  %v305 = vpack.c.b16 %v289, %v289
  %v306 = vpack.c.b16 %v290, %v290
  %v307 = vpack.c.b16 %v291, %v291
  %v308 = vpack.c.b16 %v292, %v292
  %v309 = vpack.c.b16 %v293, %v293
  %v310 = vpack.c.b16 %v294, %v294
  %v311 = vpack.c.b16 %v295, %v295
  %v312 = vpack.c.b16 %v296, %v296
  %329 = vst [vmem:[%s4] sm:$0xf] %v297
  %330 = vst [vmem:[%s4 + $0x4] sm:$0xf] %v298
  %331 = vst [vmem:[%s4 + $0x8] sm:$0xf] %v299
  %332 = vst [vmem:[%s4 + $0xc] sm:$0xf] %v300
  %333 = vst [vmem:[%s4 + $0x10] sm:$0xf] %v301
  %334 = vst [vmem:[%s4 + $0x14] sm:$0xf] %v302
  %335 = vst [vmem:[%s4 + $0x18] sm:$0xf] %v303
  %336 = vst [vmem:[%s4 + $0x1c] sm:$0xf] %v304
  %337 = vst [vmem:[%s4 + $0x20] sm:$0xf] %v305
  %338 = vst [vmem:[%s4 + $0x24] sm:$0xf] %v306
  %339 = vst [vmem:[%s4 + $0x28] sm:$0xf] %v307
  %340 = vst [vmem:[%s4 + $0x2c] sm:$0xf] %v308
  %341 = vst [vmem:[%s4 + $0x30] sm:$0xf] %v309
  %342 = vst [vmem:[%s4 + $0x34] sm:$0xf] %v310
  %343 = vst [vmem:[%s4 + $0x38] sm:$0xf] %v311
  %344 = vst [vmem:[%s4 + $0x3c] sm:$0xf] %v312
  // Predicated region
  $region18: #{encoder_layer_forward.5} parent=0 // pred_check
    _
  $region19: #{encoder_layer_forward.5} parent=0 // pred_check_branch
    %346 = sbr.rel (0) target = $region21
  $region20: #{encoder_layer_forward.5} parent=0 // pred_region
    _
  $region21: #{encoder_layer_forward.5} parent=0 // pred_fallthru
    _
  // Predicated region
  $region22: #{encoder_layer_forward.5} parent=0 // pred_check
    _
  $region23: #{encoder_layer_forward.5} parent=0 // pred_check_branch
    %348 = sbr.rel (0) target = $region25
  $region24: #{encoder_layer_forward.5} parent=0 // pred_region
    _
  $region25: #{encoder_layer_forward.5} parent=0 // pred_fallthru
    _

// kernel: encoder_layer_forward.4
$region0: #{encoder_layer_forward.4}
  #allocation0 [shape = 'u32[]', space=smem, size = 0x4, offset = 0x4, fixed_abs, tag = 'smem constant byte address 0x4 - core index']
  #allocation1 [shape = 'u32[144,128]{1,0:T(1,128)}', space=vmem, size = 0x12000, scoped, tag = 'internal scratch']
  #allocation2 [shape = 's32[1]{0}', space=sflag, size = 0x4, scoped, tag = 'scoped memory for encoder_layer_forward.4']
  #allocation3 [shape = 's32[1]{0:T(128)S(6)}', space=smem, size = 0x200, scoped, tag = 'prefetched SMEM operand 0']
  %s0 = inlined_call_operand.<no memory space> [shape: s32[1], index: 0, kind: input, shape index: {}]
  %s1 = inlined_call_operand.vmem [shape: bf16[128,128], index: 1, kind: input, shape index: {}]
  %s2 = inlined_call_operand.vmem [shape: bf16[128,128], index: 2, kind: input, shape index: {}]
  %s3 = inlined_call_operand.vmem [shape: f32[1,128], index: 3, kind: input, shape index: {}]
  %s4 = inlined_call_operand.vmem [shape: f32[128,128], index: 4, kind: output, shape index: {0}]
  %s5 = inlined_call_operand.vmem [shape: f32[1,8,128], index: 5, kind: output, shape index: {1}]
  %6 = xla_tuple %s4, %s5
  %s7 = sld [smem:[#allocation0]]
  $region30: #{encoder_layer_forward.4} parent=0
    _
  %s9 = ssub.s32 1, %s7
  %s10 = scalar_select 0, %s9, %s7
  %11 = sst [smem:[#allocation3]] %s0
  // Predicated region
  $region2: #{encoder_layer_forward.4} parent=0 // pred_check
    _
  $region3: #{encoder_layer_forward.4} parent=0 // pred_check_branch
    %13 = sbr.rel (0) target = $region5
  $region4: #{encoder_layer_forward.4} parent=0 // pred_region
    _
  $region5: #{encoder_layer_forward.4} parent=0 // pred_fallthru
    _
  // Predicated region
  $region6: #{encoder_layer_forward.4} parent=0 // pred_check
    _
  $region7: #{encoder_layer_forward.4} parent=0 // pred_check_branch
    %15 = sbr.rel (0) target = $region9
  $region8: #{encoder_layer_forward.4} parent=0 // pred_region
    _
  $region9: #{encoder_layer_forward.4} parent=0 // pred_fallthru
    _
  // Predicated region
  $region10: #{encoder_layer_forward.4} parent=0 // pred_check
    _
  $region11: #{encoder_layer_forward.4} parent=0 // pred_check_branch
    %17 = sbr.rel (0) target = $region13
  $region12: #{encoder_layer_forward.4} parent=0 // pred_region
    _
  $region13: #{encoder_layer_forward.4} parent=0 // pred_fallthru
    _
  %v19 = vld [vmem:[%s1] sm:$0xf]
  %v20 = vld [vmem:[%s1 + $0x4] sm:$0xf]
  %v21 = vld [vmem:[%s1 + $0x8] sm:$0xf]
  %v22 = vld [vmem:[%s1 + $0xc] sm:$0xf]
  %v23 = vld [vmem:[%s1 + $0x10] sm:$0xf]
  %v24 = vld [vmem:[%s1 + $0x14] sm:$0xf]
  %v25 = vld [vmem:[%s1 + $0x18] sm:$0xf]
  %v26 = vld [vmem:[%s1 + $0x1c] sm:$0xf]
  %v27 = vld [vmem:[%s1 + $0x20] sm:$0xf]
  %v28 = vld [vmem:[%s1 + $0x24] sm:$0xf]
  %v29 = vld [vmem:[%s1 + $0x28] sm:$0xf]
  %v30 = vld [vmem:[%s1 + $0x2c] sm:$0xf]
  %v31 = vld [vmem:[%s1 + $0x30] sm:$0xf]
  %v32 = vld [vmem:[%s1 + $0x34] sm:$0xf]
  %v33 = vld [vmem:[%s1 + $0x38] sm:$0xf]
  %v34 = vld [vmem:[%s1 + $0x3c] sm:$0xf]
  %v35 = vld [vmem:[%s2] sm:$0xf]
  %v36 = vld [vmem:[%s2 + $0x4] sm:$0xf]
  %v37 = vld [vmem:[%s2 + $0x8] sm:$0xf]
  %v38 = vld [vmem:[%s2 + $0xc] sm:$0xf]
  %v39 = vld [vmem:[%s2 + $0x10] sm:$0xf]
  %v40 = vld [vmem:[%s2 + $0x14] sm:$0xf]
  %v41 = vld [vmem:[%s2 + $0x18] sm:$0xf]
  %v42 = vld [vmem:[%s2 + $0x1c] sm:$0xf]
  %v43 = vld [vmem:[%s2 + $0x20] sm:$0xf]
  %v44 = vld [vmem:[%s2 + $0x24] sm:$0xf]
  %v45 = vld [vmem:[%s2 + $0x28] sm:$0xf]
  %v46 = vld [vmem:[%s2 + $0x2c] sm:$0xf]
  %v47 = vld [vmem:[%s2 + $0x30] sm:$0xf]
  %v48 = vld [vmem:[%s2 + $0x34] sm:$0xf]
  %v49 = vld [vmem:[%s2 + $0x38] sm:$0xf]
  %v50 = vld [vmem:[%s2 + $0x3c] sm:$0xf]
  %v51 = vld [vmem:[%s3] sm:$0x1]
  %v53 = vlaneseq
  %v54 = vshrl.u32 %v53, 7
  %v55 = vsub.s32 0, %v54
  %v56 = vrot.slane %v51, %v55
  %v74 = vunpack.c.l.b16 %v19
  %v75 = vunpack.c.l.b16 %v20
  %v76 = vunpack.c.l.b16 %v21
  %v77 = vunpack.c.l.b16 %v22
  %v78 = vunpack.c.l.b16 %v23
  %v79 = vunpack.c.l.b16 %v24
  %v80 = vunpack.c.l.b16 %v25
  %v81 = vunpack.c.l.b16 %v26
  %v82 = vunpack.c.l.b16 %v27
  %v83 = vunpack.c.l.b16 %v28
  %v84 = vunpack.c.l.b16 %v29
  %v85 = vunpack.c.l.b16 %v30
  %v86 = vunpack.c.l.b16 %v31
  %v87 = vunpack.c.l.b16 %v32
  %v88 = vunpack.c.l.b16 %v33
  %v89 = vunpack.c.l.b16 %v34
  %v90 = vpack.c.b16 %v75, %v74
  %v91 = vpack.c.b16 %v77, %v76
  %v92 = vpack.c.b16 %v79, %v78
  %v93 = vpack.c.b16 %v81, %v80
  %v94 = vpack.c.b16 %v83, %v82
  %v95 = vpack.c.b16 %v85, %v84
  %v96 = vpack.c.b16 %v87, %v86
  %v97 = vpack.c.b16 %v89, %v88
  %v122 = vunpack.c.l.b16 %v35
  %v123 = vunpack.c.l.b16 %v36
  %v124 = vunpack.c.l.b16 %v37
  %v125 = vunpack.c.l.b16 %v38
  %v126 = vunpack.c.l.b16 %v39
  %v127 = vunpack.c.l.b16 %v40
  %v128 = vunpack.c.l.b16 %v41
  %v129 = vunpack.c.l.b16 %v42
  %v130 = vunpack.c.l.b16 %v43
  %v131 = vunpack.c.l.b16 %v44
  %v132 = vunpack.c.l.b16 %v45
  %v133 = vunpack.c.l.b16 %v46
  %v134 = vunpack.c.l.b16 %v47
  %v135 = vunpack.c.l.b16 %v48
  %v136 = vunpack.c.l.b16 %v49
  %v137 = vunpack.c.l.b16 %v50
  %v138 = vpack.c.b16 %v123, %v122
  %v139 = vpack.c.b16 %v125, %v124
  %v140 = vpack.c.b16 %v127, %v126
  %v141 = vpack.c.b16 %v129, %v128
  %v142 = vpack.c.b16 %v131, %v130
  %v143 = vpack.c.b16 %v133, %v132
  %v144 = vpack.c.b16 %v135, %v134
  %v145 = vpack.c.b16 %v137, %v136
  %154 = vmatprep.subr.bf16.mxu0 0
  %155 = vmatpush1.bf16.msra.mxu0 %v145
  %156 = vmatprep.subr.bf16.mxu0 0
  %157 = vmatpush1.bf16.msra.mxu0 %v144
  %158 = vmatprep.subr.bf16.mxu0 0
  %159 = vmatpush1.bf16.msra.mxu0 %v143
  %160 = vmatprep.subr.bf16.mxu0 0
  %161 = vmatpush1.bf16.msra.mxu0 %v142
  %162 = vmatprep.subr.bf16.mxu0 0
  %163 = vmatpush1.bf16.msra.mxu0 %v141
  %164 = vmatprep.subr.bf16.mxu0 0
  %165 = vmatpush1.bf16.msra.mxu0 %v140
  %166 = vmatprep.subr.bf16.mxu0 0
  %167 = vmatpush1.bf16.msra.mxu0 %v139
  %168 = vmatprep.subr.bf16.mxu0 0
  %169 = vmatpush1.bf16.msra.mxu0 %v138
  %170 = vmatprep.subr.bf16.mxu0 0
  %171 = vmatpush2.bf16.msra.mxu0 0
  %172 = vmatprep.subr.bf16.mxu0 0
  %173 = vmatpush2.bf16.msra.mxu0 0
  %174 = vmatprep.subr.bf16.mxu0 0
  %175 = vmatpush2.bf16.msra.mxu0 0
  %176 = vmatprep.subr.bf16.mxu0 0
  %177 = vmatpush2.bf16.msra.mxu0 0
  %178 = vmatprep.subr.bf16.mxu0 0
  %179 = vmatpush2.bf16.msra.mxu0 0
  %180 = vmatprep.subr.bf16.mxu0 0
  %181 = vmatpush2.bf16.msra.mxu0 0
  %182 = vmatprep.subr.bf16.mxu0 0
  %183 = vmatpush2.bf16.msra.mxu0 0
  %184 = vmatprep.subr.bf16.mxu0 0
  %185 = vmatpush2.bf16.msra.mxu0 0
  %186 = vmatprep.mubr.bf16.mxu0 0
  %187 = vmatmul.mubr.bf16.gmra.mxu0 %v90
  %v188 = vpop.f32.mrf.mxu0
  %v189 = vadd.f32 %v56, %v188
  %v190 = vpop.f32.mrf.mxu0
  %v191 = vpop.f32.mrf.mxu0
  %v192 = vadd.f32 %v56, %v191
  %v193 = vpop.f32.mrf.mxu0
  %194 = vmatprep.mubr.bf16.mxu0 0
  %195 = vmatmul.mubr.bf16.gmra.mxu0 %v91
  %v196 = vpop.f32.mrf.mxu0
  %v197 = vadd.f32 %v56, %v196
  %v198 = vpop.f32.mrf.mxu0
  %v199 = vpop.f32.mrf.mxu0
  %v200 = vadd.f32 %v56, %v199
  %v201 = vpop.f32.mrf.mxu0
  %202 = vmatprep.mubr.bf16.mxu0 0
  %203 = vmatmul.mubr.bf16.gmra.mxu0 %v92
  %v204 = vpop.f32.mrf.mxu0
  %v205 = vadd.f32 %v56, %v204
  %v206 = vpop.f32.mrf.mxu0
  %v207 = vpop.f32.mrf.mxu0
  %v208 = vadd.f32 %v56, %v207
  %v209 = vpop.f32.mrf.mxu0
  %210 = vmatprep.mubr.bf16.mxu0 0
  %211 = vmatmul.mubr.bf16.gmra.mxu0 %v93
  %v212 = vpop.f32.mrf.mxu0
  %v213 = vadd.f32 %v56, %v212
  %v214 = vpop.f32.mrf.mxu0
  %v215 = vpop.f32.mrf.mxu0
  %v216 = vadd.f32 %v56, %v215
  %v217 = vpop.f32.mrf.mxu0
  %218 = vmatprep.mubr.bf16.mxu0 0
  %219 = vmatmul.mubr.bf16.gmra.mxu0 %v94
  %v220 = vpop.f32.mrf.mxu0
  %v221 = vadd.f32 %v56, %v220
  %v222 = vpop.f32.mrf.mxu0
  %v223 = vpop.f32.mrf.mxu0
  %v224 = vadd.f32 %v56, %v223
  %v225 = vpop.f32.mrf.mxu0
  %226 = vmatprep.mubr.bf16.mxu0 0
  %227 = vmatmul.mubr.bf16.gmra.mxu0 %v95
  %v228 = vpop.f32.mrf.mxu0
  %v229 = vadd.f32 %v56, %v228
  %v230 = vpop.f32.mrf.mxu0
  %v231 = vpop.f32.mrf.mxu0
  %v232 = vadd.f32 %v56, %v231
  %v233 = vpop.f32.mrf.mxu0
  %234 = vmatprep.mubr.bf16.mxu0 0
  %235 = vmatmul.mubr.bf16.gmra.mxu0 %v96
  %v236 = vpop.f32.mrf.mxu0
  %v237 = vadd.f32 %v56, %v236
  %v238 = vpop.f32.mrf.mxu0
  %v239 = vpop.f32.mrf.mxu0
  %v240 = vadd.f32 %v56, %v239
  %v241 = vpop.f32.mrf.mxu0
  %242 = vmatprep.mubr.bf16.mxu0 0
  %243 = vmatmul.mubr.bf16.gmra.mxu0 %v97
  %v244 = vpop.f32.mrf.mxu0
  %v245 = vadd.f32 %v56, %v244
  %v246 = vpop.f32.mrf.mxu0
  %v247 = vpop.f32.mrf.mxu0
  %v248 = vadd.f32 %v56, %v247
  %v249 = vpop.f32.mrf.mxu0
  %250 = vdwg.mxu0
  %s251 = smul.u32 0, 128
  %v252 = vlaneseq
  %v253 = vshrl.u32 %v252, 7
  %v254 = vadd.s32 %v253, 8
  %v255 = vadd.s32 %v253, 16
  %v256 = vadd.s32 %v253, 24
  %v257 = vadd.s32 %v253, 32
  %v258 = vadd.s32 %v253, 40
  %v259 = vadd.s32 %v253, 48
  %v260 = vadd.s32 %v253, 56
  %v261 = vadd.s32 %v253, 64
  %v262 = vadd.s32 %v253, 72
  %v263 = vadd.s32 %v253, 80
  %v264 = vadd.s32 %v253, 88
  %v265 = vadd.s32 %v253, 96
  %v266 = vadd.s32 %v253, 104
  %v267 = vadd.s32 %v253, 112
  %v268 = vadd.s32 %v253, 120
  %v269 = vstv %s251
  %v270 = vadd.s32 %v269, %v253
  %v271 = vadd.s32 %v269, %v254
  %v272 = vadd.s32 %v269, %v255
  %v273 = vadd.s32 %v269, %v256
  %v274 = vadd.s32 %v269, %v257
  %v275 = vadd.s32 %v269, %v258
  %v276 = vadd.s32 %v269, %v259
  %v277 = vadd.s32 %v269, %v260
  %v278 = vadd.s32 %v269, %v261
  %v279 = vadd.s32 %v269, %v262
  %v280 = vadd.s32 %v269, %v263
  %v281 = vadd.s32 %v269, %v264
  %v282 = vadd.s32 %v269, %v265
  %v283 = vadd.s32 %v269, %v266
  %v284 = vadd.s32 %v269, %v267
  %v285 = vadd.s32 %v269, %v268
  %s286 = sld [smem:[#allocation3]]
  %v287 = vstv %s286
  %vm288 = vcmp.lt.s32.totalorder %v270, %v287
  %vm289 = vcmp.lt.s32.totalorder %v271, %v287
  %vm290 = vcmp.lt.s32.totalorder %v272, %v287
  %vm291 = vcmp.lt.s32.totalorder %v273, %v287
  %vm292 = vcmp.lt.s32.totalorder %v274, %v287
  %vm293 = vcmp.lt.s32.totalorder %v275, %v287
  %vm294 = vcmp.lt.s32.totalorder %v276, %v287
  %vm295 = vcmp.lt.s32.totalorder %v277, %v287
  %vm296 = vcmp.lt.s32.totalorder %v278, %v287
  %vm297 = vcmp.lt.s32.totalorder %v279, %v287
  %vm298 = vcmp.lt.s32.totalorder %v280, %v287
  %vm299 = vcmp.lt.s32.totalorder %v281, %v287
  %vm300 = vcmp.lt.s32.totalorder %v282, %v287
  %vm301 = vcmp.lt.s32.totalorder %v283, %v287
  %vm302 = vcmp.lt.s32.totalorder %v284, %v287
  %vm303 = vcmp.lt.s32.totalorder %v285, %v287
  %v304 = vsel %vm288, %v189, 0.0
  %v305 = vsel %vm289, %v192, 0.0
  %v306 = vsel %vm290, %v197, 0.0
  %v307 = vsel %vm291, %v200, 0.0
  %v308 = vsel %vm292, %v205, 0.0
  %v309 = vsel %vm293, %v208, 0.0
  %v310 = vsel %vm294, %v213, 0.0
  %v311 = vsel %vm295, %v216, 0.0
  %v312 = vsel %vm296, %v221, 0.0
  %v313 = vsel %vm297, %v224, 0.0
  %v314 = vsel %vm298, %v229, 0.0
  %v315 = vsel %vm299, %v232, 0.0
  %v316 = vsel %vm300, %v237, 0.0
  %v317 = vsel %vm301, %v240, 0.0
  %v318 = vsel %vm302, %v245, 0.0
  %v319 = vsel %vm303, %v248, 0.0
  %320 = vst [vmem:[%s4] sm:$0xff] %v304
  %321 = vst [vmem:[%s4 + $0x8] sm:$0xff] %v305
  %322 = vst [vmem:[%s4 + $0x10] sm:$0xff] %v306
  %323 = vst [vmem:[%s4 + $0x18] sm:$0xff] %v307
  %324 = vst [vmem:[%s4 + $0x20] sm:$0xff] %v308
  %325 = vst [vmem:[%s4 + $0x28] sm:$0xff] %v309
  %326 = vst [vmem:[%s4 + $0x30] sm:$0xff] %v310
  %327 = vst [vmem:[%s4 + $0x38] sm:$0xff] %v311
  %328 = vst [vmem:[%s4 + $0x40] sm:$0xff] %v312
  %329 = vst [vmem:[%s4 + $0x48] sm:$0xff] %v313
  %330 = vst [vmem:[%s4 + $0x50] sm:$0xff] %v314
  %331 = vst [vmem:[%s4 + $0x58] sm:$0xff] %v315
  %332 = vst [vmem:[%s4 + $0x60] sm:$0xff] %v316
  %333 = vst [vmem:[%s4 + $0x68] sm:$0xff] %v317
  %334 = vst [vmem:[%s4 + $0x70] sm:$0xff] %v318
  %335 = vst [vmem:[%s4 + $0x78] sm:$0xff] %v319
  %v336 = vadd.f32 %v304, %v305
  %v337 = vadd.f32 %v336, %v306
  %v338 = vadd.f32 %v337, %v307
  %v339 = vadd.f32 %v338, %v308
  %v340 = vadd.f32 %v339, %v309
  %v341 = vadd.f32 %v340, %v310
  %v342 = vadd.f32 %v341, %v311
  %v343 = vadd.f32 %v342, %v312
  %v344 = vadd.f32 %v343, %v313
  %v345 = vadd.f32 %v344, %v314
  %v346 = vadd.f32 %v345, %v315
  %v347 = vadd.f32 %v346, %v316
  %v348 = vadd.f32 %v347, %v317
  %v349 = vadd.f32 %v348, %v318
  %v350 = vadd.f32 %v349, %v319
  %v351 = vrot.slane %v350, 4
  %v352 = vadd.f32 %v350, %v351
  %v353 = vrot.slane %v352, 2
  %v354 = vadd.f32 %v352, %v353
  %v355 = vrot.slane %v354, 1
  %v356 = vadd.f32 %v354, %v355
  %v357 = vmul.f32 %v304, %v304
  %v358 = vmul.f32 %v305, %v305
  %v359 = vmul.f32 %v306, %v306
  %v360 = vmul.f32 %v307, %v307
  %v361 = vmul.f32 %v308, %v308
  %v362 = vmul.f32 %v309, %v309
  %v363 = vmul.f32 %v310, %v310
  %v364 = vmul.f32 %v311, %v311
  %v365 = vmul.f32 %v312, %v312
  %v366 = vmul.f32 %v313, %v313
  %v367 = vmul.f32 %v314, %v314
  %v368 = vmul.f32 %v315, %v315
  %v369 = vmul.f32 %v316, %v316
  %v370 = vmul.f32 %v317, %v317
  %v371 = vmul.f32 %v318, %v318
  %v372 = vmul.f32 %v319, %v319
  %v373 = vadd.f32 %v357, %v358
  %v374 = vadd.f32 %v373, %v359
  %v375 = vadd.f32 %v374, %v360
  %v376 = vadd.f32 %v375, %v361
  %v377 = vadd.f32 %v376, %v362
  %v378 = vadd.f32 %v377, %v363
  %v379 = vadd.f32 %v378, %v364
  %v380 = vadd.f32 %v379, %v365
  %v381 = vadd.f32 %v380, %v366
  %v382 = vadd.f32 %v381, %v367
  %v383 = vadd.f32 %v382, %v368
  %v384 = vadd.f32 %v383, %v369
  %v385 = vadd.f32 %v384, %v370
  %v386 = vadd.f32 %v385, %v371
  %v387 = vadd.f32 %v386, %v372
  %v388 = vrot.slane %v387, 4
  %v389 = vadd.f32 %v387, %v388
  %v390 = vrot.slane %v389, 2
  %v391 = vadd.f32 %v389, %v390
  %v392 = vrot.slane %v391, 1
  %v393 = vadd.f32 %v391, %v392
  %vm394 = vcmp.eq.s32.totalorder %v253, 0
  %vm395 = vcmp.eq.s32.totalorder %v253, 1
  %v396 = vsel %vm395, %v393, 0.0
  %v397 = vsel %vm394, %v356, %v396
  %398 = vst [vmem:[%s5] sm:$0xff] %v397
  // Predicated region
  $region14: #{encoder_layer_forward.4} parent=0 // pred_check
    _
  $region15: #{encoder_layer_forward.4} parent=0 // pred_check_branch
    %400 = sbr.rel (0) target = $region17
  $region16: #{encoder_layer_forward.4} parent=0 // pred_region
    _
  $region17: #{encoder_layer_forward.4} parent=0 // pred_fallthru
    _
  // Predicated region
  $region18: #{encoder_layer_forward.4} parent=0 // pred_check
    _
  $region19: #{encoder_layer_forward.4} parent=0 // pred_check_branch
    %402 = sbr.rel (0) target = $region21
  $region20: #{encoder_layer_forward.4} parent=0 // pred_region
    _
  $region21: #{encoder_layer_forward.4} parent=0 // pred_fallthru
    _
  // Predicated region
  $region22: #{encoder_layer_forward.4} parent=0 // pred_check
    _
  $region23: #{encoder_layer_forward.4} parent=0 // pred_check_branch
    %404 = sbr.rel (0) target = $region25
  $region24: #{encoder_layer_forward.4} parent=0 // pred_region
    _
  $region25: #{encoder_layer_forward.4} parent=0 // pred_fallthru
    _
  // Predicated region
  $region26: #{encoder_layer_forward.4} parent=0 // pred_check
    _
  $region27: #{encoder_layer_forward.4} parent=0 // pred_check_branch
    %406 = sbr.rel (0) target = $region29
  $region28: #{encoder_layer_forward.4} parent=0 // pred_region
    _
  $region29: #{encoder_layer_forward.4} parent=0 // pred_fallthru
    _

// kernel: encoder_layer_forward.6
$region0: #{encoder_layer_forward.6}
  #allocation0 [shape = 'u32[]', space=smem, size = 0x4, offset = 0x4, fixed_abs, tag = 'smem constant byte address 0x4 - core index']
  #allocation1 [shape = 'u32[144,128]{1,0:T(1,128)}', space=vmem, size = 0x12000, scoped, tag = 'internal scratch']
  #allocation2 [shape = 'f32[128,128]{1,0:T(8,128)}', space=vmem, size = 0x10000, scoped, tag = 'scratch operand']
  #allocation3 [shape = 's32[1]{0}', space=sflag, size = 0x4, scoped, tag = 'scoped memory for encoder_layer_forward.6']
  #allocation4 [shape = 's32[1]{0:T(128)S(6)}', space=smem, size = 0x200, scoped, tag = 'prefetched SMEM operand 0']
  #allocation5 [shape = 's32[1]{0:T(128)S(6)}', space=smem, size = 0x200, scoped, tag = 'prefetched SMEM operand 1']
  %s0 = inlined_call_operand.<no memory space> [shape: s32[1], index: 0, kind: input, shape index: {}]
  %s1 = inlined_call_operand.<no memory space> [shape: s32[1], index: 1, kind: input, shape index: {}]
  %s2 = inlined_call_operand.vmem [shape: bf16[128,128], index: 2, kind: input, shape index: {}]
  %s3 = inlined_call_operand.vmem [shape: bf16[128,128], index: 3, kind: input, shape index: {}]
  %s4 = inlined_call_operand.vmem [shape: f32[1,128], index: 4, kind: input, shape index: {}]
  %s5 = inlined_call_operand.vmem [shape: f32[128,128], index: 5, kind: output, shape index: {0}]
  %s6 = inlined_call_operand.vmem [shape: f32[1,8,128], index: 6, kind: output, shape index: {1}]
  %7 = xla_tuple %s5, %s6
  %s8 = sld [smem:[#allocation0]]
  $region42: #{encoder_layer_forward.6} parent=0
    _
  %s10 = ssub.s32 1, %s8
  %s11 = scalar_select 0, %s10, %s8
  %12 = sst [smem:[#allocation4]] %s0
  %13 = sst [smem:[#allocation5]] %s1
  // Predicated region
  $region2: #{encoder_layer_forward.6} parent=0 // pred_check
    _
  $region3: #{encoder_layer_forward.6} parent=0 // pred_check_branch
    %15 = sbr.rel (0) target = $region5
  $region4: #{encoder_layer_forward.6} parent=0 // pred_region
    _
  $region5: #{encoder_layer_forward.6} parent=0 // pred_fallthru
    _
  // Predicated region
  $region6: #{encoder_layer_forward.6} parent=0 // pred_check
    _
  $region7: #{encoder_layer_forward.6} parent=0 // pred_check_branch
    %17 = sbr.rel (0) target = $region9
  $region8: #{encoder_layer_forward.6} parent=0 // pred_region
    _
  $region9: #{encoder_layer_forward.6} parent=0 // pred_fallthru
    _
  // Predicated region
  $region10: #{encoder_layer_forward.6} parent=0 // pred_check
    _
  $region11: #{encoder_layer_forward.6} parent=0 // pred_check_branch
    %19 = sbr.rel (0) target = $region13
  $region12: #{encoder_layer_forward.6} parent=0 // pred_region
    _
  $region13: #{encoder_layer_forward.6} parent=0 // pred_fallthru
    _
  %p21 = scmp.eq.s32.totalorder 0, 0
  // Predicated region
  $region14: #{encoder_layer_forward.6} parent=0 // pred_check
    %p22 = pneg %p21
  $region15: #{encoder_layer_forward.6} parent=0 // pred_check_branch
    %24 = sbr.rel (%p22) target = $region17
  $region16: #{encoder_layer_forward.6} parent=0 // pred_region
    %25 = vst [vmem:[#allocation2] sm:$0xff] 0.0
    %26 = vst [vmem:[#allocation2 + $0x8] sm:$0xff] 0.0
    %27 = vst [vmem:[#allocation2 + $0x10] sm:$0xff] 0.0
    %28 = vst [vmem:[#allocation2 + $0x18] sm:$0xff] 0.0
    %29 = vst [vmem:[#allocation2 + $0x20] sm:$0xff] 0.0
    %30 = vst [vmem:[#allocation2 + $0x28] sm:$0xff] 0.0
    %31 = vst [vmem:[#allocation2 + $0x30] sm:$0xff] 0.0
    %32 = vst [vmem:[#allocation2 + $0x38] sm:$0xff] 0.0
    %33 = vst [vmem:[#allocation2 + $0x40] sm:$0xff] 0.0
    %34 = vst [vmem:[#allocation2 + $0x48] sm:$0xff] 0.0
    %35 = vst [vmem:[#allocation2 + $0x50] sm:$0xff] 0.0
    %36 = vst [vmem:[#allocation2 + $0x58] sm:$0xff] 0.0
    %37 = vst [vmem:[#allocation2 + $0x60] sm:$0xff] 0.0
    %38 = vst [vmem:[#allocation2 + $0x68] sm:$0xff] 0.0
    %39 = vst [vmem:[#allocation2 + $0x70] sm:$0xff] 0.0
    %40 = vst [vmem:[#allocation2 + $0x78] sm:$0xff] 0.0
  $region17: #{encoder_layer_forward.6} parent=0 // pred_fallthru
    _
  %s41 = sadd.s32 0, 0
  %s42 = sld [smem:[#allocation4 + %s41]]
  %p43 = scmp.ne.s32.totalorder %s42, 0
  // Predicated region
  $region18: #{encoder_layer_forward.6} parent=0 // pred_check
    %p44 = pneg %p43
  $region19: #{encoder_layer_forward.6} parent=0 // pred_check_branch
    %46 = sbr.rel (%p44) target = $region21
  $region20: #{encoder_layer_forward.6} parent=0 // pred_region
    %v47 = vld [vmem:[#allocation2] sm:$0xff]
    %v48 = vld [vmem:[#allocation2 + $0x8] sm:$0xff]
    %v49 = vld [vmem:[#allocation2 + $0x10] sm:$0xff]
    %v50 = vld [vmem:[#allocation2 + $0x18] sm:$0xff]
    %v51 = vld [vmem:[#allocation2 + $0x20] sm:$0xff]
    %v52 = vld [vmem:[#allocation2 + $0x28] sm:$0xff]
    %v53 = vld [vmem:[#allocation2 + $0x30] sm:$0xff]
    %v54 = vld [vmem:[#allocation2 + $0x38] sm:$0xff]
    %v55 = vld [vmem:[#allocation2 + $0x40] sm:$0xff]
    %v56 = vld [vmem:[#allocation2 + $0x48] sm:$0xff]
    %v57 = vld [vmem:[#allocation2 + $0x50] sm:$0xff]
    %v58 = vld [vmem:[#allocation2 + $0x58] sm:$0xff]
    %v59 = vld [vmem:[#allocation2 + $0x60] sm:$0xff]
    %v60 = vld [vmem:[#allocation2 + $0x68] sm:$0xff]
    %v61 = vld [vmem:[#allocation2 + $0x70] sm:$0xff]
    %v62 = vld [vmem:[#allocation2 + $0x78] sm:$0xff]
    %v63 = vld [vmem:[%s2] sm:$0xf]
    %v64 = vld [vmem:[%s2 + $0x4] sm:$0xf]
    %v65 = vld [vmem:[%s2 + $0x8] sm:$0xf]
    %v66 = vld [vmem:[%s2 + $0xc] sm:$0xf]
    %v67 = vld [vmem:[%s2 + $0x10] sm:$0xf]
    %v68 = vld [vmem:[%s2 + $0x14] sm:$0xf]
    %v69 = vld [vmem:[%s2 + $0x18] sm:$0xf]
    %v70 = vld [vmem:[%s2 + $0x1c] sm:$0xf]
    %v71 = vld [vmem:[%s2 + $0x20] sm:$0xf]
    %v72 = vld [vmem:[%s2 + $0x24] sm:$0xf]
    %v73 = vld [vmem:[%s2 + $0x28] sm:$0xf]
    %v74 = vld [vmem:[%s2 + $0x2c] sm:$0xf]
    %v75 = vld [vmem:[%s2 + $0x30] sm:$0xf]
    %v76 = vld [vmem:[%s2 + $0x34] sm:$0xf]
    %v77 = vld [vmem:[%s2 + $0x38] sm:$0xf]
    %v78 = vld [vmem:[%s2 + $0x3c] sm:$0xf]
    %v79 = vld [vmem:[%s3] sm:$0xf]
    %v80 = vld [vmem:[%s3 + $0x4] sm:$0xf]
    %v81 = vld [vmem:[%s3 + $0x8] sm:$0xf]
    %v82 = vld [vmem:[%s3 + $0xc] sm:$0xf]
    %v83 = vld [vmem:[%s3 + $0x10] sm:$0xf]
    %v84 = vld [vmem:[%s3 + $0x14] sm:$0xf]
    %v85 = vld [vmem:[%s3 + $0x18] sm:$0xf]
    %v86 = vld [vmem:[%s3 + $0x1c] sm:$0xf]
    %v87 = vld [vmem:[%s3 + $0x20] sm:$0xf]
    %v88 = vld [vmem:[%s3 + $0x24] sm:$0xf]
    %v89 = vld [vmem:[%s3 + $0x28] sm:$0xf]
    %v90 = vld [vmem:[%s3 + $0x2c] sm:$0xf]
    %v91 = vld [vmem:[%s3 + $0x30] sm:$0xf]
    %v92 = vld [vmem:[%s3 + $0x34] sm:$0xf]
    %v93 = vld [vmem:[%s3 + $0x38] sm:$0xf]
    %v94 = vld [vmem:[%s3 + $0x3c] sm:$0xf]
    %v111 = vunpack.c.l.b16 %v63
    %v112 = vunpack.c.l.b16 %v64
    %v113 = vunpack.c.l.b16 %v65
    %v114 = vunpack.c.l.b16 %v66
    %v115 = vunpack.c.l.b16 %v67
    %v116 = vunpack.c.l.b16 %v68
    %v117 = vunpack.c.l.b16 %v69
    %v118 = vunpack.c.l.b16 %v70
    %v119 = vunpack.c.l.b16 %v71
    %v120 = vunpack.c.l.b16 %v72
    %v121 = vunpack.c.l.b16 %v73
    %v122 = vunpack.c.l.b16 %v74
    %v123 = vunpack.c.l.b16 %v75
    %v124 = vunpack.c.l.b16 %v76
    %v125 = vunpack.c.l.b16 %v77
    %v126 = vunpack.c.l.b16 %v78
    %v127 = vpack.c.b16 %v112, %v111
    %v128 = vpack.c.b16 %v114, %v113
    %v129 = vpack.c.b16 %v116, %v115
    %v130 = vpack.c.b16 %v118, %v117
    %v131 = vpack.c.b16 %v120, %v119
    %v132 = vpack.c.b16 %v122, %v121
    %v133 = vpack.c.b16 %v124, %v123
    %v134 = vpack.c.b16 %v126, %v125
    %v159 = vunpack.c.l.b16 %v79
    %v160 = vunpack.c.l.b16 %v80
    %v161 = vunpack.c.l.b16 %v81
    %v162 = vunpack.c.l.b16 %v82
    %v163 = vunpack.c.l.b16 %v83
    %v164 = vunpack.c.l.b16 %v84
    %v165 = vunpack.c.l.b16 %v85
    %v166 = vunpack.c.l.b16 %v86
    %v167 = vunpack.c.l.b16 %v87
    %v168 = vunpack.c.l.b16 %v88
    %v169 = vunpack.c.l.b16 %v89
    %v170 = vunpack.c.l.b16 %v90
    %v171 = vunpack.c.l.b16 %v91
    %v172 = vunpack.c.l.b16 %v92
    %v173 = vunpack.c.l.b16 %v93
    %v174 = vunpack.c.l.b16 %v94
    %v175 = vpack.c.b16 %v160, %v159
    %v176 = vpack.c.b16 %v162, %v161
    %v177 = vpack.c.b16 %v164, %v163
    %v178 = vpack.c.b16 %v166, %v165
    %v179 = vpack.c.b16 %v168, %v167
    %v180 = vpack.c.b16 %v170, %v169
    %v181 = vpack.c.b16 %v172, %v171
    %v182 = vpack.c.b16 %v174, %v173
    %191 = vmatprep.subr.bf16.mxu0 0
    %192 = vmatpush1.bf16.msra.mxu0 %v182
    %193 = vmatprep.subr.bf16.mxu0 0
    %194 = vmatpush1.bf16.msra.mxu0 %v181
    %195 = vmatprep.subr.bf16.mxu0 0
    %196 = vmatpush1.bf16.msra.mxu0 %v180
    %197 = vmatprep.subr.bf16.mxu0 0
    %198 = vmatpush1.bf16.msra.mxu0 %v179
    %199 = vmatprep.subr.bf16.mxu0 0
    %200 = vmatpush1.bf16.msra.mxu0 %v178
    %201 = vmatprep.subr.bf16.mxu0 0
    %202 = vmatpush1.bf16.msra.mxu0 %v177
    %203 = vmatprep.subr.bf16.mxu0 0
    %204 = vmatpush1.bf16.msra.mxu0 %v176
    %205 = vmatprep.subr.bf16.mxu0 0
    %206 = vmatpush1.bf16.msra.mxu0 %v175
    %207 = vmatprep.subr.bf16.mxu0 0
    %208 = vmatpush2.bf16.msra.mxu0 0
    %209 = vmatprep.subr.bf16.mxu0 0
    %210 = vmatpush2.bf16.msra.mxu0 0
    %211 = vmatprep.subr.bf16.mxu0 0
    %212 = vmatpush2.bf16.msra.mxu0 0
    %213 = vmatprep.subr.bf16.mxu0 0
    %214 = vmatpush2.bf16.msra.mxu0 0
    %215 = vmatprep.subr.bf16.mxu0 0
    %216 = vmatpush2.bf16.msra.mxu0 0
    %217 = vmatprep.subr.bf16.mxu0 0
    %218 = vmatpush2.bf16.msra.mxu0 0
    %219 = vmatprep.subr.bf16.mxu0 0
    %220 = vmatpush2.bf16.msra.mxu0 0
    %221 = vmatprep.subr.bf16.mxu0 0
    %222 = vmatpush2.bf16.msra.mxu0 0
    %223 = vmatprep.mubr.bf16.mxu0 0
    %224 = vmatmul.mubr.bf16.gmra.mxu0 %v127
    %v225 = vpop.f32.mrf.mxu0
    %v226 = vadd.f32 0.0, %v225
    %v227 = vpop.f32.mrf.mxu0
    %v228 = vpop.f32.mrf.mxu0
    %v229 = vadd.f32 0.0, %v228
    %v230 = vpop.f32.mrf.mxu0
    %231 = vmatprep.mubr.bf16.mxu0 0
    %232 = vmatmul.mubr.bf16.gmra.mxu0 %v128
    %v233 = vpop.f32.mrf.mxu0
    %v234 = vadd.f32 0.0, %v233
    %v235 = vpop.f32.mrf.mxu0
    %v236 = vpop.f32.mrf.mxu0
    %v237 = vadd.f32 0.0, %v236
    %v238 = vpop.f32.mrf.mxu0
    %239 = vmatprep.mubr.bf16.mxu0 0
    %240 = vmatmul.mubr.bf16.gmra.mxu0 %v129
    %v241 = vpop.f32.mrf.mxu0
    %v242 = vadd.f32 0.0, %v241
    %v243 = vpop.f32.mrf.mxu0
    %v244 = vpop.f32.mrf.mxu0
    %v245 = vadd.f32 0.0, %v244
    %v246 = vpop.f32.mrf.mxu0
    %247 = vmatprep.mubr.bf16.mxu0 0
    %248 = vmatmul.mubr.bf16.gmra.mxu0 %v130
    %v249 = vpop.f32.mrf.mxu0
    %v250 = vadd.f32 0.0, %v249
    %v251 = vpop.f32.mrf.mxu0
    %v252 = vpop.f32.mrf.mxu0
    %v253 = vadd.f32 0.0, %v252
    %v254 = vpop.f32.mrf.mxu0
    %255 = vmatprep.mubr.bf16.mxu0 0
    %256 = vmatmul.mubr.bf16.gmra.mxu0 %v131
    %v257 = vpop.f32.mrf.mxu0
    %v258 = vadd.f32 0.0, %v257
    %v259 = vpop.f32.mrf.mxu0
    %v260 = vpop.f32.mrf.mxu0
    %v261 = vadd.f32 0.0, %v260
    %v262 = vpop.f32.mrf.mxu0
    %263 = vmatprep.mubr.bf16.mxu0 0
    %264 = vmatmul.mubr.bf16.gmra.mxu0 %v132
    %v265 = vpop.f32.mrf.mxu0
    %v266 = vadd.f32 0.0, %v265
    %v267 = vpop.f32.mrf.mxu0
    %v268 = vpop.f32.mrf.mxu0
    %v269 = vadd.f32 0.0, %v268
    %v270 = vpop.f32.mrf.mxu0
    %271 = vmatprep.mubr.bf16.mxu0 0
    %272 = vmatmul.mubr.bf16.gmra.mxu0 %v133
    %v273 = vpop.f32.mrf.mxu0
    %v274 = vadd.f32 0.0, %v273
    %v275 = vpop.f32.mrf.mxu0
    %v276 = vpop.f32.mrf.mxu0
    %v277 = vadd.f32 0.0, %v276
    %v278 = vpop.f32.mrf.mxu0
    %279 = vmatprep.mubr.bf16.mxu0 0
    %280 = vmatmul.mubr.bf16.gmra.mxu0 %v134
    %v281 = vpop.f32.mrf.mxu0
    %v282 = vadd.f32 0.0, %v281
    %v283 = vpop.f32.mrf.mxu0
    %v284 = vpop.f32.mrf.mxu0
    %v285 = vadd.f32 0.0, %v284
    %v286 = vpop.f32.mrf.mxu0
    %287 = vdwg.mxu0
    %v288 = vadd.f32 %v47, %v226
    %v289 = vadd.f32 %v48, %v229
    %v290 = vadd.f32 %v49, %v234
    %v291 = vadd.f32 %v50, %v237
    %v292 = vadd.f32 %v51, %v242
    %v293 = vadd.f32 %v52, %v245
    %v294 = vadd.f32 %v53, %v250
    %v295 = vadd.f32 %v54, %v253
    %v296 = vadd.f32 %v55, %v258
    %v297 = vadd.f32 %v56, %v261
    %v298 = vadd.f32 %v57, %v266
    %v299 = vadd.f32 %v58, %v269
    %v300 = vadd.f32 %v59, %v274
    %v301 = vadd.f32 %v60, %v277
    %v302 = vadd.f32 %v61, %v282
    %v303 = vadd.f32 %v62, %v285
    %304 = vst [vmem:[#allocation2] sm:$0xff] %v288
    %305 = vst [vmem:[#allocation2 + $0x8] sm:$0xff] %v289
    %306 = vst [vmem:[#allocation2 + $0x10] sm:$0xff] %v290
    %307 = vst [vmem:[#allocation2 + $0x18] sm:$0xff] %v291
    %308 = vst [vmem:[#allocation2 + $0x20] sm:$0xff] %v292
    %309 = vst [vmem:[#allocation2 + $0x28] sm:$0xff] %v293
    %310 = vst [vmem:[#allocation2 + $0x30] sm:$0xff] %v294
    %311 = vst [vmem:[#allocation2 + $0x38] sm:$0xff] %v295
    %312 = vst [vmem:[#allocation2 + $0x40] sm:$0xff] %v296
    %313 = vst [vmem:[#allocation2 + $0x48] sm:$0xff] %v297
    %314 = vst [vmem:[#allocation2 + $0x50] sm:$0xff] %v298
    %315 = vst [vmem:[#allocation2 + $0x58] sm:$0xff] %v299
    %316 = vst [vmem:[#allocation2 + $0x60] sm:$0xff] %v300
    %317 = vst [vmem:[#allocation2 + $0x68] sm:$0xff] %v301
    %318 = vst [vmem:[#allocation2 + $0x70] sm:$0xff] %v302
    %319 = vst [vmem:[#allocation2 + $0x78] sm:$0xff] %v303
  $region21: #{encoder_layer_forward.6} parent=0 // pred_fallthru
    _
  // Predicated region
  $region22: #{encoder_layer_forward.6} parent=0 // pred_check
    %p320 = pneg %p21
  $region23: #{encoder_layer_forward.6} parent=0 // pred_check_branch
    %322 = sbr.rel (%p320) target = $region25
  $region24: #{encoder_layer_forward.6} parent=0 // pred_region
    %v323 = vld [vmem:[#allocation2] sm:$0xff]
    %v324 = vld [vmem:[#allocation2 + $0x8] sm:$0xff]
    %v325 = vld [vmem:[#allocation2 + $0x10] sm:$0xff]
    %v326 = vld [vmem:[#allocation2 + $0x18] sm:$0xff]
    %v327 = vld [vmem:[#allocation2 + $0x20] sm:$0xff]
    %v328 = vld [vmem:[#allocation2 + $0x28] sm:$0xff]
    %v329 = vld [vmem:[#allocation2 + $0x30] sm:$0xff]
    %v330 = vld [vmem:[#allocation2 + $0x38] sm:$0xff]
    %v331 = vld [vmem:[#allocation2 + $0x40] sm:$0xff]
    %v332 = vld [vmem:[#allocation2 + $0x48] sm:$0xff]
    %v333 = vld [vmem:[#allocation2 + $0x50] sm:$0xff]
    %v334 = vld [vmem:[#allocation2 + $0x58] sm:$0xff]
    %v335 = vld [vmem:[#allocation2 + $0x60] sm:$0xff]
    %v336 = vld [vmem:[#allocation2 + $0x68] sm:$0xff]
    %v337 = vld [vmem:[#allocation2 + $0x70] sm:$0xff]
    %v338 = vld [vmem:[#allocation2 + $0x78] sm:$0xff]
    %v339 = vld [vmem:[%s4] sm:$0x1]
    %v341 = vlaneseq
    %v342 = vshrl.u32 %v341, 7
    %v343 = vsub.s32 0, %v342
    %v344 = vrot.slane %v339, %v343
    %v346 = vadd.f32 %v323, %v344
    %v347 = vadd.f32 %v324, %v344
    %v348 = vadd.f32 %v325, %v344
    %v349 = vadd.f32 %v326, %v344
    %v350 = vadd.f32 %v327, %v344
    %v351 = vadd.f32 %v328, %v344
    %v352 = vadd.f32 %v329, %v344
    %v353 = vadd.f32 %v330, %v344
    %v354 = vadd.f32 %v331, %v344
    %v355 = vadd.f32 %v332, %v344
    %v356 = vadd.f32 %v333, %v344
    %v357 = vadd.f32 %v334, %v344
    %v358 = vadd.f32 %v335, %v344
    %v359 = vadd.f32 %v336, %v344
    %v360 = vadd.f32 %v337, %v344
    %v361 = vadd.f32 %v338, %v344
    %s362 = smul.u32 0, 128
    %v363 = vlaneseq
    %v364 = vshrl.u32 %v363, 7
    %v365 = vadd.s32 %v364, 8
    %v366 = vadd.s32 %v364, 16
    %v367 = vadd.s32 %v364, 24
    %v368 = vadd.s32 %v364, 32
    %v369 = vadd.s32 %v364, 40
    %v370 = vadd.s32 %v364, 48
    %v371 = vadd.s32 %v364, 56
    %v372 = vadd.s32 %v364, 64
    %v373 = vadd.s32 %v364, 72
    %v374 = vadd.s32 %v364, 80
    %v375 = vadd.s32 %v364, 88
    %v376 = vadd.s32 %v364, 96
    %v377 = vadd.s32 %v364, 104
    %v378 = vadd.s32 %v364, 112
    %v379 = vadd.s32 %v364, 120
    %v380 = vstv %s362
    %v381 = vadd.s32 %v380, %v364
    %v382 = vadd.s32 %v380, %v365
    %v383 = vadd.s32 %v380, %v366
    %v384 = vadd.s32 %v380, %v367
    %v385 = vadd.s32 %v380, %v368
    %v386 = vadd.s32 %v380, %v369
    %v387 = vadd.s32 %v380, %v370
    %v388 = vadd.s32 %v380, %v371
    %v389 = vadd.s32 %v380, %v372
    %v390 = vadd.s32 %v380, %v373
    %v391 = vadd.s32 %v380, %v374
    %v392 = vadd.s32 %v380, %v375
    %v393 = vadd.s32 %v380, %v376
    %v394 = vadd.s32 %v380, %v377
    %v395 = vadd.s32 %v380, %v378
    %v396 = vadd.s32 %v380, %v379
    %s397 = sld [smem:[#allocation5]]
    %v398 = vstv %s397
    %vm399 = vcmp.lt.s32.totalorder %v381, %v398
    %vm400 = vcmp.lt.s32.totalorder %v382, %v398
    %vm401 = vcmp.lt.s32.totalorder %v383, %v398
    %vm402 = vcmp.lt.s32.totalorder %v384, %v398
    %vm403 = vcmp.lt.s32.totalorder %v385, %v398
    %vm404 = vcmp.lt.s32.totalorder %v386, %v398
    %vm405 = vcmp.lt.s32.totalorder %v387, %v398
    %vm406 = vcmp.lt.s32.totalorder %v388, %v398
    %vm407 = vcmp.lt.s32.totalorder %v389, %v398
    %vm408 = vcmp.lt.s32.totalorder %v390, %v398
    %vm409 = vcmp.lt.s32.totalorder %v391, %v398
    %vm410 = vcmp.lt.s32.totalorder %v392, %v398
    %vm411 = vcmp.lt.s32.totalorder %v393, %v398
    %vm412 = vcmp.lt.s32.totalorder %v394, %v398
    %vm413 = vcmp.lt.s32.totalorder %v395, %v398
    %vm414 = vcmp.lt.s32.totalorder %v396, %v398
    %v415 = vsel %vm399, %v346, 0.0
    %v416 = vsel %vm400, %v347, 0.0
    %v417 = vsel %vm401, %v348, 0.0
    %v418 = vsel %vm402, %v349, 0.0
    %v419 = vsel %vm403, %v350, 0.0
    %v420 = vsel %vm404, %v351, 0.0
    %v421 = vsel %vm405, %v352, 0.0
    %v422 = vsel %vm406, %v353, 0.0
    %v423 = vsel %vm407, %v354, 0.0
    %v424 = vsel %vm408, %v355, 0.0
    %v425 = vsel %vm409, %v356, 0.0
    %v426 = vsel %vm410, %v357, 0.0
    %v427 = vsel %vm411, %v358, 0.0
    %v428 = vsel %vm412, %v359, 0.0
    %v429 = vsel %vm413, %v360, 0.0
    %v430 = vsel %vm414, %v361, 0.0
    %431 = vst [vmem:[%s5] sm:$0xff] %v415
    %432 = vst [vmem:[%s5 + $0x8] sm:$0xff] %v416
    %433 = vst [vmem:[%s5 + $0x10] sm:$0xff] %v417
    %434 = vst [vmem:[%s5 + $0x18] sm:$0xff] %v418
    %435 = vst [vmem:[%s5 + $0x20] sm:$0xff] %v419
    %436 = vst [vmem:[%s5 + $0x28] sm:$0xff] %v420
    %437 = vst [vmem:[%s5 + $0x30] sm:$0xff] %v421
    %438 = vst [vmem:[%s5 + $0x38] sm:$0xff] %v422
    %439 = vst [vmem:[%s5 + $0x40] sm:$0xff] %v423
    %440 = vst [vmem:[%s5 + $0x48] sm:$0xff] %v424
    %441 = vst [vmem:[%s5 + $0x50] sm:$0xff] %v425
    %442 = vst [vmem:[%s5 + $0x58] sm:$0xff] %v426
    %443 = vst [vmem:[%s5 + $0x60] sm:$0xff] %v427
    %444 = vst [vmem:[%s5 + $0x68] sm:$0xff] %v428
    %445 = vst [vmem:[%s5 + $0x70] sm:$0xff] %v429
    %446 = vst [vmem:[%s5 + $0x78] sm:$0xff] %v430
    %v447 = vadd.f32 %v415, %v416
    %v448 = vadd.f32 %v447, %v417
    %v449 = vadd.f32 %v448, %v418
    %v450 = vadd.f32 %v449, %v419
    %v451 = vadd.f32 %v450, %v420
    %v452 = vadd.f32 %v451, %v421
    %v453 = vadd.f32 %v452, %v422
    %v454 = vadd.f32 %v453, %v423
    %v455 = vadd.f32 %v454, %v424
    %v456 = vadd.f32 %v455, %v425
    %v457 = vadd.f32 %v456, %v426
    %v458 = vadd.f32 %v457, %v427
    %v459 = vadd.f32 %v458, %v428
    %v460 = vadd.f32 %v459, %v429
    %v461 = vadd.f32 %v460, %v430
    %v462 = vrot.slane %v461, 4
    %v463 = vadd.f32 %v461, %v462
    %v464 = vrot.slane %v463, 2
    %v465 = vadd.f32 %v463, %v464
    %v466 = vrot.slane %v465, 1
    %v467 = vadd.f32 %v465, %v466
    %v468 = vmul.f32 %v415, %v415
    %v469 = vmul.f32 %v416, %v416
    %v470 = vmul.f32 %v417, %v417
    %v471 = vmul.f32 %v418, %v418
    %v472 = vmul.f32 %v419, %v419
    %v473 = vmul.f32 %v420, %v420
    %v474 = vmul.f32 %v421, %v421
    %v475 = vmul.f32 %v422, %v422
    %v476 = vmul.f32 %v423, %v423
    %v477 = vmul.f32 %v424, %v424
    %v478 = vmul.f32 %v425, %v425
    %v479 = vmul.f32 %v426, %v426
    %v480 = vmul.f32 %v427, %v427
    %v481 = vmul.f32 %v428, %v428
    %v482 = vmul.f32 %v429, %v429
    %v483 = vmul.f32 %v430, %v430
    %v484 = vadd.f32 %v468, %v469
    %v485 = vadd.f32 %v484, %v470
    %v486 = vadd.f32 %v485, %v471
    %v487 = vadd.f32 %v486, %v472
    %v488 = vadd.f32 %v487, %v473
    %v489 = vadd.f32 %v488, %v474
    %v490 = vadd.f32 %v489, %v475
    %v491 = vadd.f32 %v490, %v476
    %v492 = vadd.f32 %v491, %v477
    %v493 = vadd.f32 %v492, %v478
    %v494 = vadd.f32 %v493, %v479
    %v495 = vadd.f32 %v494, %v480
    %v496 = vadd.f32 %v495, %v481
    %v497 = vadd.f32 %v496, %v482
    %v498 = vadd.f32 %v497, %v483
    %v499 = vrot.slane %v498, 4
    %v500 = vadd.f32 %v498, %v499
    %v501 = vrot.slane %v500, 2
    %v502 = vadd.f32 %v500, %v501
    %v503 = vrot.slane %v502, 1
    %v504 = vadd.f32 %v502, %v503
    %vm505 = vcmp.eq.s32.totalorder %v364, 0
    %vm506 = vcmp.eq.s32.totalorder %v364, 1
    %v507 = vsel %vm506, %v504, 0.0
    %v508 = vsel %vm505, %v467, %v507
    %509 = vst [vmem:[%s6] sm:$0xff] %v508
  $region25: #{encoder_layer_forward.6} parent=0 // pred_fallthru
    _
  // Predicated region
  $region26: #{encoder_layer_forward.6} parent=0 // pred_check
    _
  $region27: #{encoder_layer_forward.6} parent=0 // pred_check_branch
    %511 = sbr.rel (0) target = $region29
  $region28: #{encoder_layer_forward.6} parent=0 // pred_region
    _
  $region29: #{encoder_layer_forward.6} parent=0 // pred_fallthru
    _
  // Predicated region
  $region30: #{encoder_layer_forward.6} parent=0 // pred_check
    _
  $region31: #{encoder_layer_forward.6} parent=0 // pred_check_branch
    %513 = sbr.rel (0) target = $region33
  $region32: #{encoder_layer_forward.6} parent=0 // pred_region
    _
  $region33: #{encoder_layer_forward.6} parent=0 // pred_fallthru
    _
  // Predicated region
  $region34: #{encoder_layer_forward.6} parent=0 // pred_check
    _
  $region35: #{encoder_layer_forward.6} parent=0 // pred_check_branch
    %515 = sbr.rel (0) target = $region37
  $region36: #{encoder_layer_forward.6} parent=0 // pred_region
    _
  $region37: #{encoder_layer_forward.6} parent=0 // pred_fallthru
    _
  // Predicated region
  $region38: #{encoder_layer_forward.6} parent=0 // pred_check
    _
  $region39: #{encoder_layer_forward.6} parent=0 // pred_check_branch
    %517 = sbr.rel (0) target = $region41
  $region40: #{encoder_layer_forward.6} parent=0 // pred_region
    _
  $region41: #{encoder_layer_forward.6} parent=0 // pred_fallthru
    _

</llo_original>
